<compile_context>
chip_gen: v6e
topology: v6e:2x2x1
jax: 0.10.0
libtpu: 0.0.40
codegen_flags: <defaults>
</compile_context>

<pallas_src>
import functools

import jax
import jax.numpy as jnp
import numpy as np
from jax.experimental import pallas as pl
from jax.experimental.pallas import tpu as pltpu


def _rim_cgru_kernel(xrows_ref, h0_ref, wx_ref, whzr_ref, whn_ref, bias_ref,
                     hout_ref, gx_ref, hbuf, rhbuf, *, T, H, WC):
    """One grid step == the full T-step ConvGRU recurrence for one batch elem.

    xrows_ref : (T*H, Kx)            bf16 row-im2col of x (rows y-1/y/y+1);
                                          the dx taps live inside wx_ref.
    h0_ref    : (H, W*Chid)          f32  initial hidden state (lane-dense).
    wx_ref    : (Kx, 3*W*Chid)       bf16 banded input  -> [z|r|n] weights.
    whzr_ref  : (3*W*Chid, 2*W*Chid) bf16 banded hidden -> [z|r]   weights.
    whn_ref   : (3*W*Chid, W*Chid)   bf16 banded hidden -> n       weights.
    bias_ref  : (1, 3*W*Chid)        f32  gate biases tiled over x.
    hout_ref  : (H, W*Chid)          f32  final hidden state.
    gx_ref    : (T*H, 3*W*Chid)      f32  scratch: x-path gates, all T steps.
    hbuf/rhbuf: (H+2, W*Chid)        f32  scratch: h / r*h with zero halo rows.
    """
    # ---- x path hoisted out of the recurrence: one MXU matmul for all T
    # timesteps (M = T*H), bias folded in once per grid step.  Output columns
    # are ordered (gate, x, channel), so per-step gate slabs below are plain
    # 128-lane-aligned slices. ----
    gx_ref[...] = (
        jnp.dot(xrows_ref[...], wx_ref[...],
                preferred_element_type=jnp.float32)
        + bias_ref[...])

    # ---- hidden-state buffers: zero halo rows once per grid step ----
    hbuf[...] = jnp.zeros_like(hbuf)
    rhbuf[...] = jnp.zeros_like(rhbuf)
    hbuf[1:H + 1, :] = h0_ref[...]

    def conv_rows(buf_ref, w_ref):
        # 3x3 conv as ONE banded matmul: rows y-1 / y / y+1 concatenated along
        # lanes (three full 128-lane pieces, no lane shifting); the dx taps are
        # inside the banded weight matrix.
        s = jnp.concatenate(
            [buf_ref[0:H, :], buf_ref[1:H + 1, :], buf_ref[2:H + 2, :]],
            axis=1).astype(jnp.bfloat16)                     # (H, 3*WC)
        return jnp.dot(s, w_ref[...], preferred_element_type=jnp.float32)

    def step(t, carry):
        row0 = pl.multiple_of(t * H, H)
        gx_t = gx_ref[pl.ds(row0, H), :]                     # (H, 3*WC) f32
        h = hbuf[1:H + 1, :]                                 # (H, WC)   f32

        ghzr = conv_rows(hbuf, whzr_ref)                     # (H, 2*WC) f32
        zr = jax.nn.sigmoid(gx_t[:, :2 * WC] + ghzr)         # fused z/r slab
        z = zr[:, :WC]
        r = zr[:, WC:]

        rhbuf[1:H + 1, :] = r * h
        ghn = conv_rows(rhbuf, whn_ref)                      # (H, WC) f32
        n_gate = jnp.tanh(gx_t[:, 2 * WC:] + ghn)

        # h kept in f32 across the recurrence; only matmul operands are bf16.
        hbuf[1:H + 1, :] = (1.0 - z) * h + z * n_gate
        return carry

    jax.lax.fori_loop(0, T, step, 0)

    # Lane-dense (H, W*Chid) full-width store (no masked partial stores).
    hout_ref[...] = hbuf[1:H + 1, :]


def _band_expand(w_hwio, W, gates):
    """(3, 3, Cin, G*Cg) conv kernel -> (3*W*Cin, G*W*Cg) banded matmul weight.

    Row index    = dy*(W*Cin) + x_in*Cin + c_in   (matches the row-im2col)
    Column index = g*(W*Cg)   + x_out*Cg + c_out  (lane-dense per gate)
    Nonzero only on the |x_in - x_out| <= 1 band (the dx taps).
    """
    kh, kw, cin, cout = w_hwio.shape
    assert kh == 3 and kw == 3 and cout % gates == 0
    cg = cout // gates
    big = jnp.zeros((3, W * cin, W, cout), w_hwio.dtype)
    for dx in range(3):
        for xo in range(W):
            xi = xo + dx - 1
            if 0 <= xi < W:
                big = big.at[:, xi * cin:(xi + 1) * cin, xo, :].set(
                    w_hwio[:, dx])
    big = big.reshape(3, W * cin, W, gates, cg)
    big = jnp.transpose(big, (0, 1, 3, 2, 4))       # columns -> (g, x_out, cg)
    return big.reshape(3 * W * cin, gates * W * cg)


def _build_call(T, B, H, W, Cin, Chid, K_x):
    WC = W * Chid
    TH = T * H
    kernel = functools.partial(_rim_cgru_kernel, T=T, H=H, WC=WC)

    # VMEM budget: double-buffered blocks + scratches, generous floor,
    # capped below v7x's 64 MiB physical per-TC VMEM.
    block_bytes = (TH * K_x * 2 + 2 * H * WC * 4 + K_x * 3 * WC * 2
                   + 3 * WC * 2 * WC * 2 + 3 * WC * WC * 2 + 3 * WC * 4)
    scratch_bytes = TH * 3 * WC * 4 + 2 * (H + 2) * WC * 4
    vmem_limit = int(min(48 * 2 ** 20,
                         max(32 * 2 ** 20,
                             4 * (2 * block_bytes + scratch_bytes))))

    return pl.pallas_call(
        kernel,
        out_shape=jax.ShapeDtypeStruct((B, H, WC), jnp.float32),
        grid_spec=pltpu.PrefetchScalarGridSpec(
            num_scalar_prefetch=0,
            grid=(B,),                                  # batch only; T in-kernel
            in_specs=[
                pl.BlockSpec((None, TH, K_x), lambda b: (b, 0, 0)),
                pl.BlockSpec((None, H, WC), lambda b: (b, 0, 0)),
                pl.BlockSpec((K_x, 3 * WC), lambda b: (0, 0)),
                pl.BlockSpec((3 * WC, 2 * WC), lambda b: (0, 0)),
                pl.BlockSpec((3 * WC, WC), lambda b: (0, 0)),
                pl.BlockSpec((1, 3 * WC), lambda b: (0, 0)),
            ],
            out_specs=pl.BlockSpec((None, H, WC), lambda b: (b, 0, 0)),
            scratch_shapes=[
                pltpu.VMEM((TH, 3 * WC), jnp.float32),      # gx, all T steps
                pltpu.VMEM((H + 2, WC), jnp.float32),       # h   (zero halo rows)
                pltpu.VMEM((H + 2, WC), jnp.float32),       # r*h (zero halo rows)
            ],
        ),
        compiler_params=pltpu.CompilerParams(
            dimension_semantics=("parallel",),              # feeds both v7x TCs
            vmem_limit_bytes=vmem_limit),
    )


def rim_cgru_forward(x_seq, h0, wx, whzr, whn, bias, seq_len):
    """x_seq: (T, B, H, W, Cin) f32, h0: (B, H, W, Chid) f32, weights HWIO."""
    T, B, H, W, Cin = x_seq.shape
    assert seq_len == T
    Chid = h0.shape[-1]
    WC = W * Chid

    # ---- non-recurrent prep in XLA (layout only, no recurrent compute) ----
    # Row-direction im2col of x (dy in {-1,0,+1}); the dx direction is folded
    # into the banded weight so the kernel's gx is already lane-dense in a
    # (gate, x, channel) column order.
    x_b = jnp.transpose(x_seq, (1, 0, 2, 3, 4)).reshape(B, T, H, W * Cin)
    zrow = jnp.zeros((B, T, 1, W * Cin), x_seq.dtype)
    xrows = jnp.concatenate([
        jnp.concatenate([zrow, x_b[:, :, :-1]], axis=2),    # row y-1 (dy=0)
        x_b,                                                # row y   (dy=1)
        jnp.concatenate([x_b[:, :, 1:], zrow], axis=2),     # row y+1 (dy=2)
    ], axis=-1)                                             # (B,T,H,3*W*Cin)
    K_raw = 3 * W * Cin
    K_x = ((K_raw + 127) // 128) * 128                      # lane-align K
    xrows = jnp.pad(xrows, ((0, 0), (0, 0), (0, 0), (0, K_x - K_raw)))
    xrows = xrows.reshape(B, T * H, K_x).astype(jnp.bfloat16)

    wx_big = jnp.pad(_band_expand(wx, W, gates=3),
                     ((0, K_x - K_raw), (0, 0))).astype(jnp.bfloat16)
    whzr_big = _band_expand(whzr, W, gates=2).astype(jnp.bfloat16)
    whn_big = _band_expand(whn, W, gates=1).astype(jnp.bfloat16)
    bias_big = jnp.broadcast_to(bias.reshape(3, 1, Chid),
                                (3, W, Chid)).reshape(1, 3 * WC)
    bias_big = bias_big.astype(jnp.float32)

    h0_2d = h0.reshape(B, H, WC)                            # lane-dense h0

    call = _build_call(T, B, H, W, Cin, Chid, K_x)
    out = call(xrows, h0_2d, wx_big, whzr_big, whn_big, bias_big)
    return out.reshape(B, H, W, Chid)


def _ref_forward(x_seq, h0, wx, whzr, whn, bias):
    """Pure-JAX f32 reference (same math, plain jnp)."""
    T, B, H, W, _ = x_seq.shape
    Chid = h0.shape[-1]

    def conv3x3(inp, w):
        ip = jnp.pad(inp, ((0, 0), (1, 1), (1, 1), (0, 0)))
        out = 0.0
        for dy in range(3):
            for dx in range(3):
                out = out + jnp.einsum(
                    "bhwc,cd->bhwd", ip[:, dy:dy + H, dx:dx + W, :], w[dy, dx],
                    precision=jax.lax.Precision.HIGHEST)
        return out

    h = h0
    for t in range(T):
        gx = conv3x3(x_seq[t], wx)
        gh = conv3x3(h, whzr)
        z = jax.nn.sigmoid(gx[..., :Chid] + gh[..., :Chid] + bias[0, :Chid])
        r = jax.nn.sigmoid(gx[..., Chid:2 * Chid] + gh[..., Chid:2 * Chid]
                           + bias[0, Chid:2 * Chid])
        n = jnp.tanh(gx[..., 2 * Chid:] + conv3x3(r * h, whn)
                     + bias[0, 2 * Chid:])
        h = (1.0 - z) * h + z * n
    return h


if __name__ == "__main__":
    # Small shapes consistent with the module: ninp=4 input channels,
    # nlayers=1, num_blocks=2 RIM mechanisms of 8 hidden channels each.
    T, B, H, W = 8, 2, 8, 8
    Cin, num_blocks, block_hid = 4, 2, 8
    Chid = num_blocks * block_hid            # W*Chid = 128 -> lane-dense slabs

    key = jax.random.PRNGKey(0)
    k_x, k_h, k_wx, k_wzr, k_wn, k_b = jax.random.split(key, 6)

    x_seq = jax.random.normal(k_x, (T, B, H, W, Cin), jnp.float32)
    h0 = 0.1 * jax.random.normal(k_h, (B, H, W, Chid), jnp.float32)

    # Deterministic synthetic parameters (no checkpoint).
    wx = 0.1 * jax.random.normal(k_wx, (3, 3, Cin, 3 * Chid), jnp.float32)

    # Block-diagonal hidden->hidden weights: each RIM block only reads its own
    # hidden channels.
    blk = jnp.arange(Chid) // block_hid
    diag = (blk[:, None] == blk[None, :]).astype(jnp.float32)       # (Chid, Chid)
    mask_zr = jnp.concatenate([diag, diag], axis=1)                 # (Chid, 2*Chid)
    whzr = (0.1 * jax.random.normal(k_wzr, (3, 3, Chid, 2 * Chid), jnp.float32)
            * mask_zr[None, None])
    whn = (0.1 * jax.random.normal(k_wn, (3, 3, Chid, Chid), jnp.float32)
           * diag[None, None])
    bias = 0.01 * jax.random.normal(k_b, (1, 3 * Chid), jnp.float32)

    h_final = rim_cgru_forward(x_seq, h0, wx, whzr, whn, bias, seq_len=T)
    jax.block_until_ready(h_final)

    h_ref = _ref_forward(x_seq, h0, wx, whzr, whn, bias)
    # bf16 MXU operands (f32 accumulation) vs. an f32 HIGHEST-precision
    # reference over an 8-step recurrence -> slightly loosened tolerance.
    np.testing.assert_allclose(np.asarray(h_final), np.asarray(h_ref),
                               rtol=3e-2, atol=3e-2)
    print("KERNEL_OK")
</pallas_src>

<mosaic_0001>
module attributes {stable_mosaic.version = 11 : i64} {
  func.func @_rim_cgru_kernel(%arg0: i32, %arg1: memref<1x64x128xbf16, #tpu.memory_space<vmem>>, %arg2: memref<1x8x128xf32, #tpu.memory_space<vmem>>, %arg3: memref<128x384xbf16, #tpu.memory_space<vmem>>, %arg4: memref<384x256xbf16, #tpu.memory_space<vmem>>, %arg5: memref<384x128xbf16, #tpu.memory_space<vmem>>, %arg6: memref<1x384xf32, #tpu.memory_space<vmem>>, %arg7: memref<1x8x128xf32, #tpu.memory_space<vmem>>, %arg8: memref<64x384xf32, #tpu.memory_space<vmem>>, %arg9: memref<10x128xf32, #tpu.memory_space<vmem>>, %arg10: memref<10x128xf32, #tpu.memory_space<vmem>>) attributes {dimension_semantics = [#tpu.dimension_semantics<parallel>], iteration_bounds = array<i64: 2>, scalar_prefetch = 0 : i64, scratch_operands = 3 : i64, tpu.core_type = #tpu.core_type<tc>, window_params = [{transform_indices = @transform_0, window_bounds = array<i64: 1, 64, 128>}, {transform_indices = @transform_1, window_bounds = array<i64: 1, 8, 128>}, {pipeline_mode = #tpu.pipeline_mode<synchronous>, transform_indices = @transform_2, window_bounds = array<i64: 128, 384>}, {pipeline_mode = #tpu.pipeline_mode<synchronous>, transform_indices = @transform_3, window_bounds = array<i64: 384, 256>}, {pipeline_mode = #tpu.pipeline_mode<synchronous>, transform_indices = @transform_4, window_bounds = array<i64: 384, 128>}, {pipeline_mode = #tpu.pipeline_mode<synchronous>, transform_indices = @transform_5, window_bounds = array<i64: 1, 384>}, {transform_indices = @transform_6, window_bounds = array<i64: 1, 8, 128>}]} {
    %c0 = arith.constant 0 : index
    %c0_0 = arith.constant 0 : index
    %c0_1 = arith.constant 0 : index
    %0 = vector.load %arg1[%c0, %c0_0, %c0_1] : memref<1x64x128xbf16, #tpu.memory_space<vmem>>, vector<1x64x128xbf16>
    %1 = vector.shape_cast %0 : vector<1x64x128xbf16> to vector<64x128xbf16>
    %c0_2 = arith.constant 0 : index
    %c0_3 = arith.constant 0 : index
    %2 = vector.load %arg3[%c0_2, %c0_3] : memref<128x384xbf16, #tpu.memory_space<vmem>>, vector<128x384xbf16>
    %cst = arith.constant dense<0.000000e+00> : vector<64x384xf32>
    %3 = tpu.matmul %1, %2, %cst {dimension_numbers = #tpu.dot_dimension_numbers<[1], [0], [0], [1], [0, 0, 1, 1], [], []>} : vector<64x128xbf16>, vector<128x384xbf16>, vector<64x384xf32> -> vector<64x384xf32>
    %c0_4 = arith.constant 0 : index
    %c0_5 = arith.constant 0 : index
    %4 = vector.load %arg6[%c0_4, %c0_5] : memref<1x384xf32, #tpu.memory_space<vmem>>, vector<1x384xf32>
    %5 = vector.broadcast %4 : vector<1x384xf32> to vector<64x384xf32>
    %6 = arith.addf %3, %5 : vector<64x384xf32>
    %c0_6 = arith.constant 0 : index
    %c0_7 = arith.constant 0 : index
    %7 = vector.load %arg8[%c0_6, %c0_7] : memref<64x384xf32, #tpu.memory_space<vmem>>, vector<64x384xf32>
    tpu.vector_store %arg8[%c0_6, %c0_7], %6 {strides = array<i32>} : memref<64x384xf32, #tpu.memory_space<vmem>>, vector<64x384xf32>,
    %cst_8 = arith.constant 0.000000e+00 : f32
    %8 = vector.broadcast %cst_8 : f32 to vector<10x128xf32>
    %c0_9 = arith.constant 0 : index
    %c0_10 = arith.constant 0 : index
    %9 = vector.load %arg9[%c0_9, %c0_10] : memref<10x128xf32, #tpu.memory_space<vmem>>, vector<10x128xf32>
    tpu.vector_store %arg9[%c0_9, %c0_10], %8 {strides = array<i32>} : memref<10x128xf32, #tpu.memory_space<vmem>>, vector<10x128xf32>,
    %cst_11 = arith.constant 0.000000e+00 : f32
    %10 = vector.broadcast %cst_11 : f32 to vector<10x128xf32>
    %c0_12 = arith.constant 0 : index
    %c0_13 = arith.constant 0 : index
    %11 = vector.load %arg10[%c0_12, %c0_13] : memref<10x128xf32, #tpu.memory_space<vmem>>, vector<10x128xf32>
    tpu.vector_store %arg10[%c0_12, %c0_13], %10 {strides = array<i32>} : memref<10x128xf32, #tpu.memory_space<vmem>>, vector<10x128xf32>,
    %c0_14 = arith.constant 0 : index
    %c0_15 = arith.constant 0 : index
    %c0_16 = arith.constant 0 : index
    %12 = vector.load %arg2[%c0_14, %c0_15, %c0_16] : memref<1x8x128xf32, #tpu.memory_space<vmem>>, vector<1x8x128xf32>
    %13 = vector.shape_cast %12 : vector<1x8x128xf32> to vector<8x128xf32>
    %c1 = arith.constant 1 : index
    %c0_17 = arith.constant 0 : index
    %14 = vector.load %arg9[%c1, %c0_17] : memref<10x128xf32, #tpu.memory_space<vmem>>, vector<8x128xf32>
    tpu.vector_store %arg9[%c1, %c0_17], %13 {strides = array<i32>} : memref<10x128xf32, #tpu.memory_space<vmem>>, vector<8x128xf32>,
    %c0_i32 = arith.constant 0 : i32
    %c8_i32 = arith.constant 8 : i32
    %15 = arith.addi %c0_i32, %c8_i32 : i32
    %c1_i32 = arith.constant 1 : i32
    scf.for %arg11 = %c0_i32 to %15 step %c1_i32  : i32 {
      %c8_i32_24 = arith.constant 8 : i32
      %20 = arith.muli %arg11, %c8_i32_24 : i32
      %21 = tpu.assume_multiple %20, 8 : i32
      %22 = arith.index_cast %21 : i32 to index
      %c0_25 = arith.constant 0 : index
      %23 = vector.load %arg8[%22, %c0_25] : memref<64x384xf32, #tpu.memory_space<vmem>>, vector<8x384xf32>
      %c1_26 = arith.constant 1 : index
      %c0_27 = arith.constant 0 : index
      %24 = vector.load %arg9[%c1_26, %c0_27] : memref<10x128xf32, #tpu.memory_space<vmem>>, vector<8x128xf32>
      %c0_28 = arith.constant 0 : index
      %c0_29 = arith.constant 0 : index
      %25 = vector.load %arg9[%c0_28, %c0_29] : memref<10x128xf32, #tpu.memory_space<vmem>>, vector<8x128xf32>
      %c1_30 = arith.constant 1 : index
      %c0_31 = arith.constant 0 : index
      %26 = vector.load %arg9[%c1_30, %c0_31] : memref<10x128xf32, #tpu.memory_space<vmem>>, vector<8x128xf32>
      %c2 = arith.constant 2 : index
      %c0_32 = arith.constant 0 : index
      %27 = vector.load %arg9[%c2, %c0_32] : memref<10x128xf32, #tpu.memory_space<vmem>>, vector<8x128xf32>
      %28 = tpu.concatenate %25, %26, %27 in 1 : vector<8x128xf32>, vector<8x128xf32>, vector<8x128xf32> -> vector<8x384xf32>
      %29 = arith.truncf %28 : vector<8x384xf32> to vector<8x384xbf16>
      %c0_33 = arith.constant 0 : index
      %c0_34 = arith.constant 0 : index
      %30 = vector.load %arg4[%c0_33, %c0_34] : memref<384x256xbf16, #tpu.memory_space<vmem>>, vector<384x256xbf16>
      %cst_35 = arith.constant dense<0.000000e+00> : vector<8x256xf32>
      %31 = tpu.matmul %29, %30, %cst_35 {dimension_numbers = #tpu.dot_dimension_numbers<[1], [0], [0], [1], [0, 0, 1, 1], [], []>} : vector<8x384xbf16>, vector<384x256xbf16>, vector<8x256xf32> -> vector<8x256xf32>
      %32 = vector.extract_strided_slice %23 {offsets = [0, 0], sizes = [8, 256], strides = [1, 1]} : vector<8x384xf32> to vector<8x256xf32>
      %33 = arith.addf %32, %31 : vector<8x256xf32>
      %34 = arith.negf %33 : vector<8x256xf32>
      %35 = math.exp %34 : vector<8x256xf32>
      %cst_36 = arith.constant 1.000000e+00 : f32
      %36 = vector.broadcast %cst_36 : f32 to vector<8x256xf32>
      %37 = arith.addf %36, %35 : vector<8x256xf32>
      %38 = arith.divf %36, %37 : vector<8x256xf32>
      %39 = vector.extract_strided_slice %38 {offsets = [0, 0], sizes = [8, 128], strides = [1, 1]} : vector<8x256xf32> to vector<8x128xf32>
      %40 = vector.extract_strided_slice %38 {offsets = [0, 128], sizes = [8, 128], strides = [1, 1]} : vector<8x256xf32> to vector<8x128xf32>
      %41 = arith.mulf %40, %24 : vector<8x128xf32>
      %c1_37 = arith.constant 1 : index
      %c0_38 = arith.constant 0 : index
      %42 = vector.load %arg10[%c1_37, %c0_38] : memref<10x128xf32, #tpu.memory_space<vmem>>, vector<8x128xf32>
      tpu.vector_store %arg10[%c1_37, %c0_38], %41 {strides = array<i32>} : memref<10x128xf32, #tpu.memory_space<vmem>>, vector<8x128xf32>,
      %c0_39 = arith.constant 0 : index
      %c0_40 = arith.constant 0 : index
      %43 = vector.load %arg10[%c0_39, %c0_40] : memref<10x128xf32, #tpu.memory_space<vmem>>, vector<8x128xf32>
      %c1_41 = arith.constant 1 : index
      %c0_42 = arith.constant 0 : index
      %44 = vector.load %arg10[%c1_41, %c0_42] : memref<10x128xf32, #tpu.memory_space<vmem>>, vector<8x128xf32>
      %c2_43 = arith.constant 2 : index
      %c0_44 = arith.constant 0 : index
      %45 = vector.load %arg10[%c2_43, %c0_44] : memref<10x128xf32, #tpu.memory_space<vmem>>, vector<8x128xf32>
      %46 = tpu.concatenate %43, %44, %45 in 1 : vector<8x128xf32>, vector<8x128xf32>, vector<8x128xf32> -> vector<8x384xf32>
      %47 = arith.truncf %46 : vector<8x384xf32> to vector<8x384xbf16>
      %c0_45 = arith.constant 0 : index
      %c0_46 = arith.constant 0 : index
      %48 = vector.load %arg5[%c0_45, %c0_46] : memref<384x128xbf16, #tpu.memory_space<vmem>>, vector<384x128xbf16>
      %cst_47 = arith.constant dense<0.000000e+00> : vector<8x128xf32>
      %49 = tpu.matmul %47, %48, %cst_47 {dimension_numbers = #tpu.dot_dimension_numbers<[1], [0], [0], [1], [0, 0, 1, 1], [], []>} : vector<8x384xbf16>, vector<384x128xbf16>, vector<8x128xf32> -> vector<8x128xf32>
      %50 = vector.extract_strided_slice %23 {offsets = [0, 256], sizes = [8, 128], strides = [1, 1]} : vector<8x384xf32> to vector<8x128xf32>
      %51 = arith.addf %50, %49 : vector<8x128xf32>
      %52 = math.tanh %51 : vector<8x128xf32>
      %cst_48 = arith.constant 1.000000e+00 : f32
      %53 = vector.broadcast %cst_48 : f32 to vector<8x128xf32>
      %54 = arith.subf %53, %39 : vector<8x128xf32>
      %55 = arith.mulf %54, %24 : vector<8x128xf32>
      %56 = arith.mulf %39, %52 : vector<8x128xf32>
      %57 = arith.addf %55, %56 : vector<8x128xf32>
      %c1_49 = arith.constant 1 : index
      %c0_50 = arith.constant 0 : index
      %58 = vector.load %arg9[%c1_49, %c0_50] : memref<10x128xf32, #tpu.memory_space<vmem>>, vector<8x128xf32>
      tpu.vector_store %arg9[%c1_49, %c0_50], %57 {strides = array<i32>} : memref<10x128xf32, #tpu.memory_space<vmem>>, vector<8x128xf32>,
    }
    %c8_i32_18 = arith.constant 8 : i32
    %c1_19 = arith.constant 1 : index
    %c0_20 = arith.constant 0 : index
    %16 = vector.load %arg9[%c1_19, %c0_20] : memref<10x128xf32, #tpu.memory_space<vmem>>, vector<8x128xf32>
    %c0_21 = arith.constant 0 : index
    %c0_22 = arith.constant 0 : index
    %c0_23 = arith.constant 0 : index
    %17 = vector.load %arg7[%c0_21, %c0_22, %c0_23] : memref<1x8x128xf32, #tpu.memory_space<vmem>>, vector<1x8x128xf32>
    %18 = vector.shape_cast %17 : vector<1x8x128xf32> to vector<8x128xf32>
    %19 = vector.shape_cast %16 : vector<8x128xf32> to vector<1x8x128xf32>
    tpu.vector_store %arg7[%c0_21, %c0_22, %c0_23], %19 {strides = array<i32>} : memref<1x8x128xf32, #tpu.memory_space<vmem>>, vector<1x8x128xf32>,
    return
  }
  func.func @transform_0(%arg0: i32) -> (i32, i32, i32) {
    %c0_i32 = arith.constant 0 : i32
    %c0_i32_0 = arith.constant 0 : i32
    %c0_i32_1 = arith.constant 0 : i32
    return %arg0, %c0_i32, %c0_i32_0 : i32, i32, i32
  }
  func.func @transform_1(%arg0: i32) -> (i32, i32, i32) {
    %c0_i32 = arith.constant 0 : i32
    %c0_i32_0 = arith.constant 0 : i32
    %c0_i32_1 = arith.constant 0 : i32
    return %arg0, %c0_i32, %c0_i32_0 : i32, i32, i32
  }
  func.func @transform_2(%arg0: i32) -> (i32, i32) {
    %c0_i32 = arith.constant 0 : i32
    %c0_i32_0 = arith.constant 0 : i32
    %c0_i32_1 = arith.constant 0 : i32
    return %c0_i32, %c0_i32_0 : i32, i32
  }
  func.func @transform_3(%arg0: i32) -> (i32, i32) {
    %c0_i32 = arith.constant 0 : i32
    %c0_i32_0 = arith.constant 0 : i32
    %c0_i32_1 = arith.constant 0 : i32
    return %c0_i32, %c0_i32_0 : i32, i32
  }
  func.func @transform_4(%arg0: i32) -> (i32, i32) {
    %c0_i32 = arith.constant 0 : i32
    %c0_i32_0 = arith.constant 0 : i32
    %c0_i32_1 = arith.constant 0 : i32
    return %c0_i32, %c0_i32_0 : i32, i32
  }
  func.func @transform_5(%arg0: i32) -> (i32, i32) {
    %c0_i32 = arith.constant 0 : i32
    %c0_i32_0 = arith.constant 0 : i32
    %c0_i32_1 = arith.constant 0 : i32
    return %c0_i32, %c0_i32_0 : i32, i32
  }
  func.func @transform_6(%arg0: i32) -> (i32, i32, i32) {
    %c0_i32 = arith.constant 0 : i32
    %c0_i32_0 = arith.constant 0 : i32
    %c0_i32_1 = arith.constant 0 : i32
    return %arg0, %c0_i32, %c0_i32_0 : i32, i32, i32
  }
}

</mosaic_0001>

<llo_original>
// kernel: tpu_custom_call.1
$region0: #{tpu_custom_call.1}
  #allocation0 [shape = 'u32[]', space=smem, size = 0x4, offset = 0x4, fixed_abs, tag = 'smem constant byte address 0x4 - core index']
  #allocation1 [shape = 'u32[144,128]{1,0:T(1,128)}', space=vmem, size = 0x12000, scoped, tag = 'internal scratch']
  #allocation2 [shape = 'f32[64,384]{1,0:T(8,128)}', space=vmem, size = 0x18000, scoped, tag = 'scratch operand']
  #allocation3 [shape = 'f32[10,128]{1,0:T(8,128)}', space=vmem, size = 0x2000, scoped, tag = 'scratch operand']
  #allocation4 [shape = 'f32[10,128]{1,0:T(8,128)}', space=vmem, size = 0x2000, scoped, tag = 'scratch operand']
  %s0 = inlined_call_operand.hbm [shape: bf16[2,64,128], index: 0, kind: input, shape index: {}]
  %s1 = inlined_call_operand.hbm [shape: f32[2,8,128], index: 1, kind: input, shape index: {}]
  %s2 = inlined_call_operand.hbm [shape: bf16[128,384], index: 2, kind: input, shape index: {}]
  %s3 = inlined_call_operand.hbm [shape: bf16[384,256], index: 3, kind: input, shape index: {}]
  %s4 = inlined_call_operand.hbm [shape: bf16[384,128], index: 4, kind: input, shape index: {}]
  %s5 = inlined_call_operand.vmem [shape: f32[1,384], index: 5, kind: input, shape index: {}]
  %s6 = inlined_call_operand.hbm [shape: f32[2,8,128], index: 6, kind: output, shape index: {}]
  %s7 = sld [smem:[#allocation0]]
  $region84: #{tpu_custom_call.1} parent=0
    _
  %s9 = ssub.s32 1, %s7
  %s10 = scalar_select 0, %s9, %s7
  $region1: #{tpu_custom_call.1} parent=0
    #allocation5 [shape = 'u8[32768]{0}', space=vmem, size = 0x8000, scoped, tag = 'input window, operand 0']
    #allocation6 [shape = 's32[2]{0}', space=sflag, size = 0x8, scoped, tag = 'scoped memory for tpu_custom_call.1']
    #allocation7 [shape = 's32[2]{0}', space=sflag, size = 0x8, scoped, tag = 'scoped memory for tpu_custom_call.1']
    #allocation8 [shape = 'u8[8192]{0}', space=vmem, size = 0x2000, scoped, tag = 'input window, operand 1']
    #allocation9 [shape = 's32[2]{0}', space=sflag, size = 0x8, scoped, tag = 'scoped memory for tpu_custom_call.1']
    #allocation10 [shape = 'u8[98304]{0}', space=vmem, size = 0x18000, scoped, tag = 'input window, operand 2, single buffered']
    #allocation11 [shape = 'u8[196608]{0}', space=vmem, size = 0x30000, scoped, tag = 'input window, operand 3, single buffered']
    #allocation12 [shape = 's32[1]{0}', space=sflag, size = 0x4, scoped, tag = 'scoped memory for tpu_custom_call.1']
    #allocation13 [shape = 'u8[98304]{0}', space=vmem, size = 0x18000, scoped, tag = 'input window, operand 4, single buffered']
    #allocation14 [shape = 'u8[8192]{0}', space=vmem, size = 0x2000, scoped, tag = 'output window, operand 0']
    %11 = vsyncpa [#allocation6], 0
    %s12 = scalar_lea.sflag [#allocation6], 1
    %13 = vsyncpa %s12, 0
    %14 = vsyncpa [#allocation9], 0
    %s15 = scalar_lea.sflag [#allocation9], 1
    %16 = vsyncpa %s15, 0
    %17 = vsyncpa [#allocation12], 0
    %18 = vsyncpa [#allocation7], 0
    %s19 = scalar_lea.sflag [#allocation7], 1
    %20 = vsyncpa %s19, 0
    loop: start=0, step=1, limit=4
    $region2: #{tpu_custom_call.1} parent=1 // loop_pre_header
      _
    $region3: #{tpu_custom_call.1} parent=1 // loop_header
      %s22 = sphi 0, %s26
      %p23 = scmp.ge.s32.totalorder %s22, 4
      %s32 = sphi 0, %s34
      %s35 = sphi 0, %s32
      %s36 = sphi 0, %s35
      %s52 = sphi 0, %s36
      %s58 = sphi 0, %s60
      %s61 = sphi 0, %s58
      %s62 = sphi 0, %s61
      %s78 = sphi 0, %s62
      %s82 = sphi 0, %s82
      %s84 = sphi 0, %s82
      %s85 = sphi 0, %s84
      %s99 = sphi 0, %s85
      %s103 = sphi 0, %s103
      %s105 = sphi 0, %s103
      %s106 = sphi 0, %s105
      %s120 = sphi 0, %s106
      %s124 = sphi 0, %s124
      %s126 = sphi 0, %s124
      %s127 = sphi 0, %s126
      %s141 = sphi 0, %s127
      %s145 = sphi 0, %s145
      %s147 = sphi 0, %s145
      %s148 = sphi 0, %s147
      %s162 = sphi 0, %s148
      %s168 = sphi 0, %s170
      %s171 = sphi 0, %s168
      %s172 = sphi 0, %s171
      %s188 = sphi 0, %s172
    $region4: #{tpu_custom_call.1} parent=1 // loop_header_branch
      %25 = sbr.rel (%p23) target = $region8
    $region5: #{tpu_custom_call.1} parent=1 // loop_body
      %s27 = ssub.s32 %s22, 1
      %s28 = ssub.s32 %s22, 2
      %s29 = sadd.s32 %s22, 1
      %s30 = ssub.s32 %s22, %s29
      %p31 = scmp.eq.s32.totalorder %s30, 0
      %s33 = sadd.s32 %s32, 1
      %s34 = scalar_select %p31, %s32, %s33
      %p37 = pneg %p31
      %p38 = scmp.eq.s32.totalorder %s22, 1
      %p39 = por %p37, %p38
      %p40 = scmp.ne.s32.totalorder %s32, %s35
      %p41 = scmp.eq.s32.totalorder %s22, 0
      %p42 = por %p40, %p41
      %p43 = scmp.ne.s32.totalorder %s32, %s35
      %p44 = scmp.eq.s32.totalorder %s27, 1
      %p45 = por %p43, %p44
      %p46 = scmp.ne.s32.totalorder %s35, %s36
      %p47 = scmp.eq.s32.totalorder %s27, 0
      %p48 = por %p46, %p47
      %p49 = scmp.ne.s32.totalorder %s35, %s36
      %p50 = scmp.eq.s32.totalorder %s28, 1
      %p51 = por %p49, %p50
      %p53 = scmp.ne.s32.totalorder %s36, %s52
      %p54 = scmp.eq.s32.totalorder %s28, 0
      %p55 = por %p53, %p54
      %s56 = ssub.s32 %s22, %s29
      %p57 = scmp.eq.s32.totalorder %s56, 0
      %s59 = sadd.s32 %s58, 1
      %s60 = scalar_select %p57, %s58, %s59
      %p63 = pneg %p57
      %p64 = scmp.eq.s32.totalorder %s22, 1
      %p65 = por %p63, %p64
      %p66 = scmp.ne.s32.totalorder %s58, %s61
      %p67 = scmp.eq.s32.totalorder %s22, 0
      %p68 = por %p66, %p67
      %p69 = scmp.ne.s32.totalorder %s58, %s61
      %p70 = scmp.eq.s32.totalorder %s27, 1
      %p71 = por %p69, %p70
      %p72 = scmp.ne.s32.totalorder %s61, %s62
      %p73 = scmp.eq.s32.totalorder %s27, 0
      %p74 = por %p72, %p73
      %p75 = scmp.ne.s32.totalorder %s61, %s62
      %p76 = scmp.eq.s32.totalorder %s28, 1
      %p77 = por %p75, %p76
      %p79 = scmp.ne.s32.totalorder %s62, %s78
      %p80 = scmp.eq.s32.totalorder %s28, 0
      %p81 = por %p79, %p80
      %s83 = sadd.s32 %s82, 1
      %p86 = scmp.eq.s32.totalorder %s22, 1
      %p87 = scmp.ne.s32.totalorder %s82, %s84
      %p88 = scmp.eq.s32.totalorder %s22, 0
      %p89 = por %p87, %p88
      %p90 = scmp.ne.s32.totalorder %s82, %s84
      %p91 = scmp.eq.s32.totalorder %s27, 1
      %p92 = por %p90, %p91
      %p93 = scmp.ne.s32.totalorder %s84, %s85
      %p94 = scmp.eq.s32.totalorder %s27, 0
      %p95 = por %p93, %p94
      %p96 = scmp.ne.s32.totalorder %s84, %s85
      %p97 = scmp.eq.s32.totalorder %s28, 1
      %p98 = por %p96, %p97
      %p100 = scmp.ne.s32.totalorder %s85, %s99
      %p101 = scmp.eq.s32.totalorder %s28, 0
      %p102 = por %p100, %p101
      %s104 = sadd.s32 %s103, 1
      %p107 = scmp.eq.s32.totalorder %s22, 1
      %p108 = scmp.ne.s32.totalorder %s103, %s105
      %p109 = scmp.eq.s32.totalorder %s22, 0
      %p110 = por %p108, %p109
      %p111 = scmp.ne.s32.totalorder %s103, %s105
      %p112 = scmp.eq.s32.totalorder %s27, 1
      %p113 = por %p111, %p112
      %p114 = scmp.ne.s32.totalorder %s105, %s106
      %p115 = scmp.eq.s32.totalorder %s27, 0
      %p116 = por %p114, %p115
      %p117 = scmp.ne.s32.totalorder %s105, %s106
      %p118 = scmp.eq.s32.totalorder %s28, 1
      %p119 = por %p117, %p118
      %p121 = scmp.ne.s32.totalorder %s106, %s120
      %p122 = scmp.eq.s32.totalorder %s28, 0
      %p123 = por %p121, %p122
      %s125 = sadd.s32 %s124, 1
      %p128 = scmp.eq.s32.totalorder %s22, 1
      %p129 = scmp.ne.s32.totalorder %s124, %s126
      %p130 = scmp.eq.s32.totalorder %s22, 0
      %p131 = por %p129, %p130
      %p132 = scmp.ne.s32.totalorder %s124, %s126
      %p133 = scmp.eq.s32.totalorder %s27, 1
      %p134 = por %p132, %p133
      %p135 = scmp.ne.s32.totalorder %s126, %s127
      %p136 = scmp.eq.s32.totalorder %s27, 0
      %p137 = por %p135, %p136
      %p138 = scmp.ne.s32.totalorder %s126, %s127
      %p139 = scmp.eq.s32.totalorder %s28, 1
      %p140 = por %p138, %p139
      %p142 = scmp.ne.s32.totalorder %s127, %s141
      %p143 = scmp.eq.s32.totalorder %s28, 0
      %p144 = por %p142, %p143
      %s146 = sadd.s32 %s145, 1
      %p149 = scmp.eq.s32.totalorder %s22, 1
      %p150 = scmp.ne.s32.totalorder %s145, %s147
      %p151 = scmp.eq.s32.totalorder %s22, 0
      %p152 = por %p150, %p151
      %p153 = scmp.ne.s32.totalorder %s145, %s147
      %p154 = scmp.eq.s32.totalorder %s27, 1
      %p155 = por %p153, %p154
      %p156 = scmp.ne.s32.totalorder %s147, %s148
      %p157 = scmp.eq.s32.totalorder %s27, 0
      %p158 = por %p156, %p157
      %p159 = scmp.ne.s32.totalorder %s147, %s148
      %p160 = scmp.eq.s32.totalorder %s28, 1
      %p161 = por %p159, %p160
      %p163 = scmp.ne.s32.totalorder %s148, %s162
      %p164 = scmp.eq.s32.totalorder %s28, 0
      %p165 = por %p163, %p164
      %s166 = ssub.s32 %s22, %s29
      %p167 = scmp.eq.s32.totalorder %s166, 0
      %s169 = sadd.s32 %s168, 1
      %s170 = scalar_select %p167, %s168, %s169
      %p173 = pneg %p167
      %p174 = scmp.eq.s32.totalorder %s22, 1
      %p175 = por %p173, %p174
      %p176 = scmp.ne.s32.totalorder %s168, %s171
      %p177 = scmp.eq.s32.totalorder %s22, 0
      %p178 = por %p176, %p177
      %p179 = scmp.ne.s32.totalorder %s168, %s171
      %p180 = scmp.eq.s32.totalorder %s27, 1
      %p181 = por %p179, %p180
      %p182 = scmp.ne.s32.totalorder %s171, %s172
      %p183 = scmp.eq.s32.totalorder %s27, 0
      %p184 = por %p182, %p183
      %p185 = scmp.ne.s32.totalorder %s171, %s172
      %p186 = scmp.eq.s32.totalorder %s28, 1
      %p187 = por %p185, %p186
      %p189 = scmp.ne.s32.totalorder %s172, %s188
      %p190 = scmp.eq.s32.totalorder %s28, 0
      %p191 = por %p189, %p190
      %p192 = scmp.le.s32.totalorder 1, %s22
      %p193 = scmp.lt.s32.totalorder %s22, 3
      %p194 = pnand %p192, %p193
      %p195 = pneg %p194
      // Predicated region
      $region9: #{tpu_custom_call.1} parent=5 // pred_check
        _
      $region10: #{tpu_custom_call.1} parent=5 // pred_check_branch
        %197 = sbr.rel (%p194) target = $region12
      $region11: #{tpu_custom_call.1} parent=5 // pred_region
        %s198 = ssub.s32 %s22, 1
        // Predicated region
        $region13: #{tpu_custom_call.1} parent=11 // pred_check
          %p199 = pneg %p95
        $region14: #{tpu_custom_call.1} parent=11 // pred_check_branch
          %201 = sbr.rel (%p199) target = $region16
        $region15: #{tpu_custom_call.1} parent=11 // pred_region
          %s203 = ssub.s32 3072, 3072
          %204 = vsyncadd [#allocation9], %s203
          %s205 = sshll.u32 [#allocation10], 4
          %s206 = int_to_ptr.vmem [resolvable:$true] %s205
          %211 = dma.hbm_to_vmem [thread:$0]  %s2, 3072, %s206, [#allocation9], 192, 192, 12
        $region16: #{tpu_custom_call.1} parent=11 // pred_fallthru
          _
        // Predicated region
        $region17: #{tpu_custom_call.1} parent=11 // pred_check
          %p212 = pneg %p116
        $region18: #{tpu_custom_call.1} parent=11 // pred_check_branch
          %214 = sbr.rel (%p212) target = $region20
        $region19: #{tpu_custom_call.1} parent=11 // pred_region
          %s216 = ssub.s32 6144, 6144
          %217 = vsyncadd [#allocation12], %s216
          %s218 = sshll.u32 [#allocation11], 4
          %s219 = int_to_ptr.vmem [resolvable:$true] %s218
          %224 = dma.hbm_to_vmem [thread:$0]  %s3, 6144, %s219, [#allocation12], 128, 128, 8
        $region20: #{tpu_custom_call.1} parent=11 // pred_fallthru
          _
        // Predicated region
        $region21: #{tpu_custom_call.1} parent=11 // pred_check
          %p225 = pneg %p137
        $region22: #{tpu_custom_call.1} parent=11 // pred_check_branch
          %227 = sbr.rel (%p225) target = $region24
        $region23: #{tpu_custom_call.1} parent=11 // pred_region
          %s229 = ssub.s32 3072, 3072
          %230 = vsyncadd [#allocation12], %s229
          %s231 = sshll.u32 [#allocation13], 4
          %s232 = int_to_ptr.vmem [resolvable:$true] %s231
          %237 = dma.hbm_to_vmem [thread:$0]  %s4, 3072, %s232, [#allocation12], 64, 64, 4
        $region24: #{tpu_custom_call.1} parent=11 // pred_fallthru
          _
        // Predicated region
        $region25: #{tpu_custom_call.1} parent=11 // pred_check
          %p238 = pneg %p158
        $region26: #{tpu_custom_call.1} parent=11 // pred_check_branch
          %240 = sbr.rel (%p238) target = $region28
        $region27: #{tpu_custom_call.1} parent=11 // pred_region
          _
        $region28: #{tpu_custom_call.1} parent=11 // pred_fallthru
          _
      $region12: #{tpu_custom_call.1} parent=5 // pred_fallthru
        _
      %p241 = scmp.lt.s32.totalorder %s22, 2
      // Predicated region
      $region29: #{tpu_custom_call.1} parent=5 // pred_check
        %p242 = pneg %p241
      $region30: #{tpu_custom_call.1} parent=5 // pred_check_branch
        %244 = sbr.rel (%p242) target = $region32
      $region31: #{tpu_custom_call.1} parent=5 // pred_region
        // Predicated region
        $region33: #{tpu_custom_call.1} parent=31 // pred_check
          %p245 = pneg %p42
        $region34: #{tpu_custom_call.1} parent=31 // pred_check_branch
          %247 = sbr.rel (%p245) target = $region36
        $region35: #{tpu_custom_call.1} parent=31 // pred_region
          %s248 = sand.u32 %s32, 1
          %s249 = scalar_lea.sflag [#allocation6], %s248
          %s250 = sand.u32 %s32, 1
          %s251 = smul.addr %s250, 32
          %s252 = scalar_lea.vmem [#allocation5], %s251
          %s254 = ssub.s32 512, 512
          %255 = vsyncadd %s249, %s254
          %s256 = smul.addr %s22, 8
          %s257 = smul.addr %s256, 64
          %s258 = scalar_lea.hbm %s0, %s257
          %s259 = sshll.u32 %s252, 4
          %s260 = int_to_ptr.vmem [resolvable:$true] %s259
          %265 = dma.hbm_to_vmem [thread:$0]  %s258, 512, %s260, %s249, 64, 64, 4
        $region36: #{tpu_custom_call.1} parent=31 // pred_fallthru
          _
        // Predicated region
        $region37: #{tpu_custom_call.1} parent=31 // pred_check
          %p266 = pneg %p68
        $region38: #{tpu_custom_call.1} parent=31 // pred_check_branch
          %268 = sbr.rel (%p266) target = $region40
        $region39: #{tpu_custom_call.1} parent=31 // pred_region
          %s269 = sand.u32 %s22, 1
          %s270 = scalar_lea.sflag [#allocation9], %s269
          %s271 = sand.u32 %s58, 1
          %s272 = smul.addr %s271, 8
          %s273 = scalar_lea.vmem [#allocation8], %s272
          %s275 = ssub.s32 128, 128
          %276 = vsyncadd %s270, %s275
          %s277 = smul.addr %s22, 128
          %s278 = scalar_lea.hbm %s1, %s277
          %s280 = sshll.u32 %s273, 4
          %s281 = int_to_ptr.vmem [resolvable:$true] %s280
          %283 = dma.hbm_to_vmem [thread:$0]  %s278, 128, %s281, %s270
        $region40: #{tpu_custom_call.1} parent=31 // pred_fallthru
          _
      $region32: #{tpu_custom_call.1} parent=5 // pred_fallthru
        _
      %p284 = scmp.le.s32.totalorder 1, %s22
      %p285 = scmp.lt.s32.totalorder %s22, 3
      %p286 = pnand %p284, %p285
      %p287 = pneg %p286
      // Predicated region
      $region41: #{tpu_custom_call.1} parent=5 // pred_check
        _
      $region42: #{tpu_custom_call.1} parent=5 // pred_check_branch
        %289 = sbr.rel (%p286) target = $region44
      $region43: #{tpu_custom_call.1} parent=5 // pred_region
        %s290 = ssub.s32 %s22, 1
        %s291 = sand.u32 %s35, 1
        %s292 = scalar_lea.sflag [#allocation6], %s291
        %s293 = sand.u32 %s35, 1
        %s294 = smul.addr %s293, 32
        %s295 = scalar_lea.vmem [#allocation5], %s294
        // Predicated region
        $region45: #{tpu_custom_call.1} parent=43 // pred_check
          %p296 = pneg %p48
        $region46: #{tpu_custom_call.1} parent=43 // pred_check_branch
          %298 = sbr.rel (%p296) target = $region48
        $region47: #{tpu_custom_call.1} parent=43 // pred_region
          %299 = dma.done %s292, 512
        $region48: #{tpu_custom_call.1} parent=43 // pred_fallthru
          _
        %s300 = sand.u32 %s27, 1
        %s301 = scalar_lea.sflag [#allocation9], %s300
        %s302 = sand.u32 %s61, 1
        %s303 = smul.addr %s302, 8
        %s304 = scalar_lea.vmem [#allocation8], %s303
        // Predicated region
        $region49: #{tpu_custom_call.1} parent=43 // pred_check
          %p305 = pneg %p74
        $region50: #{tpu_custom_call.1} parent=43 // pred_check_branch
          %307 = sbr.rel (%p305) target = $region52
        $region51: #{tpu_custom_call.1} parent=43 // pred_region
          %308 = dma.done %s301, 128
        $region52: #{tpu_custom_call.1} parent=43 // pred_fallthru
          _
        // Predicated region
        $region53: #{tpu_custom_call.1} parent=43 // pred_check
          %p309 = pneg %p95
        $region54: #{tpu_custom_call.1} parent=43 // pred_check_branch
          %311 = sbr.rel (%p309) target = $region56
        $region55: #{tpu_custom_call.1} parent=43 // pred_region
          %312 = dma.done [#allocation9], 3072
        $region56: #{tpu_custom_call.1} parent=43 // pred_fallthru
          _
        // Predicated region
        $region57: #{tpu_custom_call.1} parent=43 // pred_check
          %p313 = pneg %p116
        $region58: #{tpu_custom_call.1} parent=43 // pred_check_branch
          %315 = sbr.rel (%p313) target = $region60
        $region59: #{tpu_custom_call.1} parent=43 // pred_region
          %316 = dma.done [#allocation12], 6144
        $region60: #{tpu_custom_call.1} parent=43 // pred_fallthru
          _
        // Predicated region
        $region61: #{tpu_custom_call.1} parent=43 // pred_check
          %p317 = pneg %p137
        $region62: #{tpu_custom_call.1} parent=43 // pred_check_branch
          %319 = sbr.rel (%p317) target = $region64
        $region63: #{tpu_custom_call.1} parent=43 // pred_region
          %320 = dma.done [#allocation12], 3072
        $region64: #{tpu_custom_call.1} parent=43 // pred_fallthru
          _
        %s321 = sand.u32 %s35, 1
        %s322 = scalar_lea.sflag [#allocation6], %s321
        %s323 = sand.u32 %s35, 1
        %s324 = smul.addr %s323, 32
        %s325 = scalar_lea.vmem [#allocation5], %s324
        %p326 = pneg %p48
        %p327 = pneg %p45
        %s328 = sand.u32 %s27, 1
        %s329 = scalar_lea.sflag [#allocation9], %s328
        %s330 = sand.u32 %s61, 1
        %s331 = smul.addr %s330, 8
        %s332 = scalar_lea.vmem [#allocation8], %s331
        %p333 = pneg %p74
        %p334 = pneg %p71
        %p335 = pneg %p95
        %p336 = pneg %p92
        %p337 = pneg %p116
        %p338 = pneg %p113
        %p339 = pneg %p137
        %p340 = pneg %p134
        %p341 = pneg %p158
        %p342 = pneg %p155
        %p343 = pneg %p184
        %p344 = pneg %p181
        %s345 = sand.u32 %s171, 1
        %s346 = scalar_lea.sflag [#allocation7], %s345
        %s347 = sand.u32 %s171, 1
        %s348 = smul.addr %s347, 8
        %s349 = scalar_lea.vmem [#allocation14], %s348
        %v351 = vld [vmem:[%s295] sm:$0xf]
        %v352 = vld [vmem:[%s295 + $0x4] sm:$0xf]
        %v353 = vld [vmem:[%s295 + $0x8] sm:$0xf]
        %v354 = vld [vmem:[%s295 + $0xc] sm:$0xf]
        %v355 = vld [vmem:[%s295 + $0x10] sm:$0xf]
        %v356 = vld [vmem:[%s295 + $0x14] sm:$0xf]
        %v357 = vld [vmem:[%s295 + $0x18] sm:$0xf]
        %v358 = vld [vmem:[%s295 + $0x1c] sm:$0xf]
        %v359 = vld [vmem:[#allocation10] sm:$0xff]
        %v360 = vld [vmem:[#allocation10 + $0x8] sm:$0xf]
        %v361 = vld [vmem:[#allocation10 + $0xc] sm:$0xff]
        %v362 = vld [vmem:[#allocation10 + $0x14] sm:$0xf]
        %v363 = vld [vmem:[#allocation10 + $0x18] sm:$0xff]
        %v364 = vld [vmem:[#allocation10 + $0x20] sm:$0xf]
        %v365 = vld [vmem:[#allocation10 + $0x24] sm:$0xff]
        %v366 = vld [vmem:[#allocation10 + $0x2c] sm:$0xf]
        %v367 = vld [vmem:[#allocation10 + $0x30] sm:$0xff]
        %v368 = vld [vmem:[#allocation10 + $0x38] sm:$0xf]
        %v369 = vld [vmem:[#allocation10 + $0x3c] sm:$0xff]
        %v370 = vld [vmem:[#allocation10 + $0x44] sm:$0xf]
        %v371 = vld [vmem:[#allocation10 + $0x48] sm:$0xff]
        %v372 = vld [vmem:[#allocation10 + $0x50] sm:$0xf]
        %v373 = vld [vmem:[#allocation10 + $0x54] sm:$0xff]
        %v374 = vld [vmem:[#allocation10 + $0x5c] sm:$0xf]
        %v375 = vld [vmem:[#allocation10 + $0x60] sm:$0xff]
        %v376 = vld [vmem:[#allocation10 + $0x68] sm:$0xf]
        %v377 = vld [vmem:[#allocation10 + $0x6c] sm:$0xff]
        %v378 = vld [vmem:[#allocation10 + $0x74] sm:$0xf]
        %v379 = vld [vmem:[#allocation10 + $0x78] sm:$0xff]
        %v380 = vld [vmem:[#allocation10 + $0x80] sm:$0xf]
        %v381 = vld [vmem:[#allocation10 + $0x84] sm:$0xff]
        %v382 = vld [vmem:[#allocation10 + $0x8c] sm:$0xf]
        %v383 = vld [vmem:[#allocation10 + $0x90] sm:$0xff]
        %v384 = vld [vmem:[#allocation10 + $0x98] sm:$0xf]
        %v385 = vld [vmem:[#allocation10 + $0x9c] sm:$0xff]
        %v386 = vld [vmem:[#allocation10 + $0xa4] sm:$0xf]
        %v387 = vld [vmem:[#allocation10 + $0xa8] sm:$0xff]
        %v388 = vld [vmem:[#allocation10 + $0xb0] sm:$0xf]
        %v389 = vld [vmem:[#allocation10 + $0xb4] sm:$0xff]
        %v390 = vld [vmem:[#allocation10 + $0xbc] sm:$0xf]
        %v391 = vld [vmem:[%s5] sm:$0x7]
        %v393 = vlaneseq
        %v394 = vshrl.u32 %v393, 7
        %v395 = vsub.s32 0, %v394
        %v396 = vrot.slane %v391, %v395
        %v397 = vlaneseq
        %v398 = vshrl.u32 %v397, 7
        %v399 = vsub.s32 1, %v398
        %v400 = vrot.slane %v391, %v399
        %v401 = vlaneseq
        %v402 = vshrl.u32 %v401, 7
        %v403 = vsub.s32 2, %v402
        %v404 = vrot.slane %v391, %v403
        %v416 = vunpack.c.l.b16 %v351
        %v417 = vunpack.c.l.b16 %v352
        %v418 = vunpack.c.l.b16 %v353
        %v419 = vunpack.c.l.b16 %v354
        %v420 = vunpack.c.l.b16 %v355
        %v421 = vunpack.c.l.b16 %v356
        %v422 = vunpack.c.l.b16 %v357
        %v423 = vunpack.c.l.b16 %v358
        %v424 = vpack.c.b16 %v417, %v416
        %v425 = vpack.c.b16 %v419, %v418
        %v426 = vpack.c.b16 %v421, %v420
        %v427 = vpack.c.b16 %v423, %v422
        %v464 = vunpack.c.l.b16 %v359
        %v465 = vunpack.c.h.b16 %v359
        %v466 = vunpack.c.l.b16 %v360
        %v467 = vunpack.c.l.b16 %v361
        %v468 = vunpack.c.h.b16 %v361
        %v469 = vunpack.c.l.b16 %v362
        %v470 = vunpack.c.l.b16 %v363
        %v471 = vunpack.c.h.b16 %v363
        %v472 = vunpack.c.l.b16 %v364
        %v473 = vunpack.c.l.b16 %v365
        %v474 = vunpack.c.h.b16 %v365
        %v475 = vunpack.c.l.b16 %v366
        %v476 = vunpack.c.l.b16 %v367
        %v477 = vunpack.c.h.b16 %v367
        %v478 = vunpack.c.l.b16 %v368
        %v479 = vunpack.c.l.b16 %v369
        %v480 = vunpack.c.h.b16 %v369
        %v481 = vunpack.c.l.b16 %v370
        %v482 = vunpack.c.l.b16 %v371
        %v483 = vunpack.c.h.b16 %v371
        %v484 = vunpack.c.l.b16 %v372
        %v485 = vunpack.c.l.b16 %v373
        %v486 = vunpack.c.h.b16 %v373
        %v487 = vunpack.c.l.b16 %v374
        %v488 = vunpack.c.l.b16 %v375
        %v489 = vunpack.c.h.b16 %v375
        %v490 = vunpack.c.l.b16 %v376
        %v491 = vunpack.c.l.b16 %v377
        %v492 = vunpack.c.h.b16 %v377
        %v493 = vunpack.c.l.b16 %v378
        %v494 = vunpack.c.l.b16 %v379
        %v495 = vunpack.c.h.b16 %v379
        %v496 = vunpack.c.l.b16 %v380
        %v497 = vunpack.c.l.b16 %v381
        %v498 = vunpack.c.h.b16 %v381
        %v499 = vunpack.c.l.b16 %v382
        %v500 = vunpack.c.l.b16 %v383
        %v501 = vunpack.c.h.b16 %v383
        %v502 = vunpack.c.l.b16 %v384
        %v503 = vunpack.c.l.b16 %v385
        %v504 = vunpack.c.h.b16 %v385
        %v505 = vunpack.c.l.b16 %v386
        %v506 = vunpack.c.l.b16 %v387
        %v507 = vunpack.c.h.b16 %v387
        %v508 = vunpack.c.l.b16 %v388
        %v509 = vunpack.c.l.b16 %v389
        %v510 = vunpack.c.h.b16 %v389
        %v511 = vunpack.c.l.b16 %v390
        %v512 = vpack.c.b16 %v467, %v464
        %v513 = vpack.c.b16 %v468, %v465
        %v514 = vpack.c.b16 %v469, %v466
        %v515 = vpack.c.b16 %v473, %v470
        %v516 = vpack.c.b16 %v474, %v471
        %v517 = vpack.c.b16 %v475, %v472
        %v518 = vpack.c.b16 %v479, %v476
        %v519 = vpack.c.b16 %v480, %v477
        %v520 = vpack.c.b16 %v481, %v478
        %v521 = vpack.c.b16 %v485, %v482
        %v522 = vpack.c.b16 %v486, %v483
        %v523 = vpack.c.b16 %v487, %v484
        %v524 = vpack.c.b16 %v491, %v488
        %v525 = vpack.c.b16 %v492, %v489
        %v526 = vpack.c.b16 %v493, %v490
        %v527 = vpack.c.b16 %v497, %v494
        %v528 = vpack.c.b16 %v498, %v495
        %v529 = vpack.c.b16 %v499, %v496
        %v530 = vpack.c.b16 %v503, %v500
        %v531 = vpack.c.b16 %v504, %v501
        %v532 = vpack.c.b16 %v505, %v502
        %v533 = vpack.c.b16 %v509, %v506
        %v534 = vpack.c.b16 %v510, %v507
        %v535 = vpack.c.b16 %v511, %v508
        %560 = vmatprep.subr.bf16.mxu0 %v534
        %561 = vmatpush1.bf16.msra.mxu0 %v533
        %562 = vmatprep.subr.bf16.mxu0 %v531
        %563 = vmatpush1.bf16.msra.mxu0 %v530
        %564 = vmatprep.subr.bf16.mxu0 %v528
        %565 = vmatpush1.bf16.msra.mxu0 %v527
        %566 = vmatprep.subr.bf16.mxu0 %v525
        %567 = vmatpush1.bf16.msra.mxu0 %v524
        %568 = vmatprep.subr.bf16.mxu0 %v522
        %569 = vmatpush1.bf16.msra.mxu0 %v521
        %570 = vmatprep.subr.bf16.mxu0 %v519
        %571 = vmatpush1.bf16.msra.mxu0 %v518
        %572 = vmatprep.subr.bf16.mxu0 %v516
        %573 = vmatpush1.bf16.msra.mxu0 %v515
        %574 = vmatprep.subr.bf16.mxu0 %v513
        %575 = vmatpush1.bf16.msra.mxu0 %v512
        %576 = vmatprep.subr.bf16.mxu0 0
        %577 = vmatpush2.bf16.msra.mxu0 0
        %578 = vmatprep.subr.bf16.mxu0 0
        %579 = vmatpush2.bf16.msra.mxu0 0
        %580 = vmatprep.subr.bf16.mxu0 0
        %581 = vmatpush2.bf16.msra.mxu0 0
        %582 = vmatprep.subr.bf16.mxu0 0
        %583 = vmatpush2.bf16.msra.mxu0 0
        %584 = vmatprep.subr.bf16.mxu0 0
        %585 = vmatpush2.bf16.msra.mxu0 0
        %586 = vmatprep.subr.bf16.mxu0 0
        %587 = vmatpush2.bf16.msra.mxu0 0
        %588 = vmatprep.subr.bf16.mxu0 0
        %589 = vmatpush2.bf16.msra.mxu0 0
        %590 = vmatprep.subr.bf16.mxu0 0
        %591 = vmatpush2.bf16.msra.mxu0 0
        %592 = vmatprep.mubr.bf16.mxu0 0
        %593 = vmatmul.mubr.bf16.gmra.mxu0 %v424
        %v594 = vpop.f32.mrf.mxu0
        %v595 = vadd.f32 %v396, %v594
        %v596 = vpop.f32.mrf.mxu0
        %v597 = vadd.f32 %v400, %v596
        %v598 = vpop.f32.mrf.mxu0
        %v599 = vadd.f32 %v396, %v598
        %v600 = vpop.f32.mrf.mxu0
        %v601 = vadd.f32 %v400, %v600
        %602 = vmatprep.mubr.bf16.mxu0 0
        %603 = vmatmul.mubr.bf16.gmra.mxu0 %v425
        %v604 = vpop.f32.mrf.mxu0
        %v605 = vadd.f32 %v396, %v604
        %v606 = vpop.f32.mrf.mxu0
        %v607 = vadd.f32 %v400, %v606
        %v608 = vpop.f32.mrf.mxu0
        %v609 = vadd.f32 %v396, %v608
        %v610 = vpop.f32.mrf.mxu0
        %v611 = vadd.f32 %v400, %v610
        %612 = vmatprep.mubr.bf16.mxu0 0
        %613 = vmatmul.mubr.bf16.gmra.mxu0 %v426
        %v614 = vpop.f32.mrf.mxu0
        %v615 = vadd.f32 %v396, %v614
        %v616 = vpop.f32.mrf.mxu0
        %v617 = vadd.f32 %v400, %v616
        %v618 = vpop.f32.mrf.mxu0
        %v619 = vadd.f32 %v396, %v618
        %v620 = vpop.f32.mrf.mxu0
        %v621 = vadd.f32 %v400, %v620
        %622 = vmatprep.mubr.bf16.mxu0 0
        %623 = vmatmul.mubr.bf16.gmra.mxu0 %v427
        %v624 = vpop.f32.mrf.mxu0
        %v625 = vadd.f32 %v396, %v624
        %v626 = vpop.f32.mrf.mxu0
        %v627 = vadd.f32 %v400, %v626
        %v628 = vpop.f32.mrf.mxu0
        %v629 = vadd.f32 %v396, %v628
        %v630 = vpop.f32.mrf.mxu0
        %v631 = vadd.f32 %v400, %v630
        %632 = vdwg.mxu0
        %633 = vmatprep.subr.bf16.mxu0 0
        %634 = vmatpush1.bf16.msra.mxu0 %v535
        %635 = vmatprep.subr.bf16.mxu0 0
        %636 = vmatpush1.bf16.msra.mxu0 %v532
        %637 = vmatprep.subr.bf16.mxu0 0
        %638 = vmatpush1.bf16.msra.mxu0 %v529
        %639 = vmatprep.subr.bf16.mxu0 0
        %640 = vmatpush1.bf16.msra.mxu0 %v526
        %641 = vmatprep.subr.bf16.mxu0 0
        %642 = vmatpush1.bf16.msra.mxu0 %v523
        %643 = vmatprep.subr.bf16.mxu0 0
        %644 = vmatpush1.bf16.msra.mxu0 %v520
        %645 = vmatprep.subr.bf16.mxu0 0
        %646 = vmatpush1.bf16.msra.mxu0 %v517
        %647 = vmatprep.subr.bf16.mxu0 0
        %648 = vmatpush1.bf16.msra.mxu0 %v514
        %649 = vmatprep.subr.bf16.mxu0 0
        %650 = vmatpush2.bf16.msra.mxu0 0
        %651 = vmatprep.subr.bf16.mxu0 0
        %652 = vmatpush2.bf16.msra.mxu0 0
        %653 = vmatprep.subr.bf16.mxu0 0
        %654 = vmatpush2.bf16.msra.mxu0 0
        %655 = vmatprep.subr.bf16.mxu0 0
        %656 = vmatpush2.bf16.msra.mxu0 0
        %657 = vmatprep.subr.bf16.mxu0 0
        %658 = vmatpush2.bf16.msra.mxu0 0
        %659 = vmatprep.subr.bf16.mxu0 0
        %660 = vmatpush2.bf16.msra.mxu0 0
        %661 = vmatprep.subr.bf16.mxu0 0
        %662 = vmatpush2.bf16.msra.mxu0 0
        %663 = vmatprep.subr.bf16.mxu0 0
        %664 = vmatpush2.bf16.msra.mxu0 0
        %665 = vmatprep.mubr.bf16.mxu0 0
        %666 = vmatmul.mubr.bf16.gmra.mxu0 %v424
        %v667 = vpop.f32.mrf.mxu0
        %v668 = vadd.f32 %v404, %v667
        %v669 = vpop.f32.mrf.mxu0
        %v670 = vpop.f32.mrf.mxu0
        %v671 = vadd.f32 %v404, %v670
        %v672 = vpop.f32.mrf.mxu0
        %673 = vmatprep.mubr.bf16.mxu0 0
        %674 = vmatmul.mubr.bf16.gmra.mxu0 %v425
        %v675 = vpop.f32.mrf.mxu0
        %v676 = vadd.f32 %v404, %v675
        %v677 = vpop.f32.mrf.mxu0
        %v678 = vpop.f32.mrf.mxu0
        %v679 = vadd.f32 %v404, %v678
        %v680 = vpop.f32.mrf.mxu0
        %681 = vmatprep.mubr.bf16.mxu0 0
        %682 = vmatmul.mubr.bf16.gmra.mxu0 %v426
        %v683 = vpop.f32.mrf.mxu0
        %v684 = vadd.f32 %v404, %v683
        %v685 = vpop.f32.mrf.mxu0
        %v686 = vpop.f32.mrf.mxu0
        %v687 = vadd.f32 %v404, %v686
        %v688 = vpop.f32.mrf.mxu0
        %689 = vmatprep.mubr.bf16.mxu0 0
        %690 = vmatmul.mubr.bf16.gmra.mxu0 %v427
        %v691 = vpop.f32.mrf.mxu0
        %v692 = vadd.f32 %v404, %v691
        %v693 = vpop.f32.mrf.mxu0
        %v694 = vpop.f32.mrf.mxu0
        %v695 = vadd.f32 %v404, %v694
        %v696 = vpop.f32.mrf.mxu0
        %697 = vdwg.mxu0
        %698 = vst [vmem:[#allocation2] sm:$0xff] %v595
        %699 = vst [vmem:[#allocation2 + $0x8] sm:$0xff] %v597
        %700 = vst [vmem:[#allocation2 + $0x10] sm:$0xff] %v668
        %701 = vst [vmem:[#allocation2 + $0x18] sm:$0xff] %v599
        %702 = vst [vmem:[#allocation2 + $0x20] sm:$0xff] %v601
        %703 = vst [vmem:[#allocation2 + $0x28] sm:$0xff] %v671
        %704 = vst [vmem:[#allocation2 + $0x30] sm:$0xff] %v605
        %705 = vst [vmem:[#allocation2 + $0x38] sm:$0xff] %v607
        %706 = vst [vmem:[#allocation2 + $0x40] sm:$0xff] %v676
        %707 = vst [vmem:[#allocation2 + $0x48] sm:$0xff] %v609
        %708 = vst [vmem:[#allocation2 + $0x50] sm:$0xff] %v611
        %709 = vst [vmem:[#allocation2 + $0x58] sm:$0xff] %v679
        %710 = vst [vmem:[#allocation2 + $0x60] sm:$0xff] %v615
        %711 = vst [vmem:[#allocation2 + $0x68] sm:$0xff] %v617
        %712 = vst [vmem:[#allocation2 + $0x70] sm:$0xff] %v684
        %713 = vst [vmem:[#allocation2 + $0x78] sm:$0xff] %v619
        %714 = vst [vmem:[#allocation2 + $0x80] sm:$0xff] %v621
        %715 = vst [vmem:[#allocation2 + $0x88] sm:$0xff] %v687
        %716 = vst [vmem:[#allocation2 + $0x90] sm:$0xff] %v625
        %717 = vst [vmem:[#allocation2 + $0x98] sm:$0xff] %v627
        %718 = vst [vmem:[#allocation2 + $0xa0] sm:$0xff] %v692
        %719 = vst [vmem:[#allocation2 + $0xa8] sm:$0xff] %v629
        %720 = vst [vmem:[#allocation2 + $0xb0] sm:$0xff] %v631
        %721 = vst [vmem:[#allocation2 + $0xb8] sm:$0xff] %v695
        %722 = vst [vmem:[#allocation3] sm:$0xff] 0.0
        %723 = vst [vmem:[#allocation3 + $0x8] sm:$0x3] 0.0
        %724 = vst [vmem:[#allocation4] sm:$0xff] 0.0
        %725 = vst [vmem:[#allocation4 + $0x8] sm:$0x3] 0.0
        %v726 = vld [vmem:[%s304] sm:$0xff]
        %727 = vst [vmem:[#allocation3 + $0x1] sm:$0xff] %v726
        loop: start=0, step=1, limit=8
        $region65: #{tpu_custom_call.1} parent=43 // loop_pre_header
          _
        $region66: #{tpu_custom_call.1} parent=43 // loop_header
          %s729 = sphi 0, %s733
          %p730 = scmp.ge.s32.totalorder %s729, 8
        $region67: #{tpu_custom_call.1} parent=43 // loop_header_branch
          %732 = sbr.rel (%p730) target = $region71
        $region68: #{tpu_custom_call.1} parent=43 // loop_body
          %s734 = smul.u32 %s729, 8
          %s735 = sshra.s32 %s734, 3
          %s736 = sand.u32 %s734, 7
          %s737 = smul.u32 %s735, 3
          %s738 = smul.addr %s737, 8
          %s739 = scalar_lea.vmem [#allocation2], %s738
          %v740 = vld [vmem:[%s739] sm:$0xff]
          %v741 = vld [vmem:[%s739 + $0x8] sm:$0xff]
          %v742 = vld [vmem:[%s739 + $0x10] sm:$0xff]
          %v743 = vld [vmem:[#allocation3 + $0x1] sm:$0xff]
          %v744 = vld [vmem:[#allocation3] sm:$0xff]
          %v745 = vld [vmem:[#allocation3 + $0x2] sm:$0xff]
          %v746 = vpack.c.bf16 %v744, %v744
          %v747 = vpack.c.bf16 %v743, %v743
          %v748 = vpack.c.bf16 %v745, %v745
          %v749 = vld [vmem:[#allocation11] sm:$0xff]
          %v750 = vld [vmem:[#allocation11 + $0x8] sm:$0xff]
          %v751 = vld [vmem:[#allocation11 + $0x10] sm:$0xff]
          %v752 = vld [vmem:[#allocation11 + $0x18] sm:$0xff]
          %v753 = vld [vmem:[#allocation11 + $0x20] sm:$0xff]
          %v754 = vld [vmem:[#allocation11 + $0x28] sm:$0xff]
          %v755 = vld [vmem:[#allocation11 + $0x30] sm:$0xff]
          %v756 = vld [vmem:[#allocation11 + $0x38] sm:$0xff]
          %v757 = vld [vmem:[#allocation11 + $0x40] sm:$0xff]
          %v758 = vld [vmem:[#allocation11 + $0x48] sm:$0xff]
          %v759 = vld [vmem:[#allocation11 + $0x50] sm:$0xff]
          %v760 = vld [vmem:[#allocation11 + $0x58] sm:$0xff]
          %v761 = vld [vmem:[#allocation11 + $0x60] sm:$0xff]
          %v762 = vld [vmem:[#allocation11 + $0x68] sm:$0xff]
          %v763 = vld [vmem:[#allocation11 + $0x70] sm:$0xff]
          %v764 = vld [vmem:[#allocation11 + $0x78] sm:$0xff]
          %v765 = vld [vmem:[#allocation11 + $0x80] sm:$0xff]
          %v766 = vld [vmem:[#allocation11 + $0x88] sm:$0xff]
          %v767 = vld [vmem:[#allocation11 + $0x90] sm:$0xff]
          %v768 = vld [vmem:[#allocation11 + $0x98] sm:$0xff]
          %v769 = vld [vmem:[#allocation11 + $0xa0] sm:$0xff]
          %v770 = vld [vmem:[#allocation11 + $0xa8] sm:$0xff]
          %v771 = vld [vmem:[#allocation11 + $0xb0] sm:$0xff]
          %v772 = vld [vmem:[#allocation11 + $0xb8] sm:$0xff]
          %v773 = vld [vmem:[#allocation11 + $0xc0] sm:$0xff]
          %v774 = vld [vmem:[#allocation11 + $0xc8] sm:$0xff]
          %v775 = vld [vmem:[#allocation11 + $0xd0] sm:$0xff]
          %v776 = vld [vmem:[#allocation11 + $0xd8] sm:$0xff]
          %v777 = vld [vmem:[#allocation11 + $0xe0] sm:$0xff]
          %v778 = vld [vmem:[#allocation11 + $0xe8] sm:$0xff]
          %v779 = vld [vmem:[#allocation11 + $0xf0] sm:$0xff]
          %v780 = vld [vmem:[#allocation11 + $0xf8] sm:$0xff]
          %v781 = vld [vmem:[#allocation11 + $0x100] sm:$0xff]
          %v782 = vld [vmem:[#allocation11 + $0x108] sm:$0xff]
          %v783 = vld [vmem:[#allocation11 + $0x110] sm:$0xff]
          %v784 = vld [vmem:[#allocation11 + $0x118] sm:$0xff]
          %v785 = vld [vmem:[#allocation11 + $0x120] sm:$0xff]
          %v786 = vld [vmem:[#allocation11 + $0x128] sm:$0xff]
          %v787 = vld [vmem:[#allocation11 + $0x130] sm:$0xff]
          %v788 = vld [vmem:[#allocation11 + $0x138] sm:$0xff]
          %v789 = vld [vmem:[#allocation11 + $0x140] sm:$0xff]
          %v790 = vld [vmem:[#allocation11 + $0x148] sm:$0xff]
          %v791 = vld [vmem:[#allocation11 + $0x150] sm:$0xff]
          %v792 = vld [vmem:[#allocation11 + $0x158] sm:$0xff]
          %v793 = vld [vmem:[#allocation11 + $0x160] sm:$0xff]
          %v794 = vld [vmem:[#allocation11 + $0x168] sm:$0xff]
          %v795 = vld [vmem:[#allocation11 + $0x170] sm:$0xff]
          %v796 = vld [vmem:[#allocation11 + $0x178] sm:$0xff]
          %v845 = vunpack.c.l.b16 %v749
          %v846 = vunpack.c.h.b16 %v749
          %v847 = vunpack.c.l.b16 %v750
          %v848 = vunpack.c.h.b16 %v750
          %v849 = vunpack.c.l.b16 %v751
          %v850 = vunpack.c.h.b16 %v751
          %v851 = vunpack.c.l.b16 %v752
          %v852 = vunpack.c.h.b16 %v752
          %v853 = vunpack.c.l.b16 %v753
          %v854 = vunpack.c.h.b16 %v753
          %v855 = vunpack.c.l.b16 %v754
          %v856 = vunpack.c.h.b16 %v754
          %v857 = vunpack.c.l.b16 %v755
          %v858 = vunpack.c.h.b16 %v755
          %v859 = vunpack.c.l.b16 %v756
          %v860 = vunpack.c.h.b16 %v756
          %v861 = vunpack.c.l.b16 %v757
          %v862 = vunpack.c.h.b16 %v757
          %v863 = vunpack.c.l.b16 %v758
          %v864 = vunpack.c.h.b16 %v758
          %v865 = vunpack.c.l.b16 %v759
          %v866 = vunpack.c.h.b16 %v759
          %v867 = vunpack.c.l.b16 %v760
          %v868 = vunpack.c.h.b16 %v760
          %v869 = vunpack.c.l.b16 %v761
          %v870 = vunpack.c.h.b16 %v761
          %v871 = vunpack.c.l.b16 %v762
          %v872 = vunpack.c.h.b16 %v762
          %v873 = vunpack.c.l.b16 %v763
          %v874 = vunpack.c.h.b16 %v763
          %v875 = vunpack.c.l.b16 %v764
          %v876 = vunpack.c.h.b16 %v764
          %v877 = vunpack.c.l.b16 %v765
          %v878 = vunpack.c.h.b16 %v765
          %v879 = vunpack.c.l.b16 %v766
          %v880 = vunpack.c.h.b16 %v766
          %v881 = vunpack.c.l.b16 %v767
          %v882 = vunpack.c.h.b16 %v767
          %v883 = vunpack.c.l.b16 %v768
          %v884 = vunpack.c.h.b16 %v768
          %v885 = vunpack.c.l.b16 %v769
          %v886 = vunpack.c.h.b16 %v769
          %v887 = vunpack.c.l.b16 %v770
          %v888 = vunpack.c.h.b16 %v770
          %v889 = vunpack.c.l.b16 %v771
          %v890 = vunpack.c.h.b16 %v771
          %v891 = vunpack.c.l.b16 %v772
          %v892 = vunpack.c.h.b16 %v772
          %v893 = vunpack.c.l.b16 %v773
          %v894 = vunpack.c.h.b16 %v773
          %v895 = vunpack.c.l.b16 %v774
          %v896 = vunpack.c.h.b16 %v774
          %v897 = vunpack.c.l.b16 %v775
          %v898 = vunpack.c.h.b16 %v775
          %v899 = vunpack.c.l.b16 %v776
          %v900 = vunpack.c.h.b16 %v776
          %v901 = vunpack.c.l.b16 %v777
          %v902 = vunpack.c.h.b16 %v777
          %v903 = vunpack.c.l.b16 %v778
          %v904 = vunpack.c.h.b16 %v778
          %v905 = vunpack.c.l.b16 %v779
          %v906 = vunpack.c.h.b16 %v779
          %v907 = vunpack.c.l.b16 %v780
          %v908 = vunpack.c.h.b16 %v780
          %v909 = vunpack.c.l.b16 %v781
          %v910 = vunpack.c.h.b16 %v781
          %v911 = vunpack.c.l.b16 %v782
          %v912 = vunpack.c.h.b16 %v782
          %v913 = vunpack.c.l.b16 %v783
          %v914 = vunpack.c.h.b16 %v783
          %v915 = vunpack.c.l.b16 %v784
          %v916 = vunpack.c.h.b16 %v784
          %v917 = vunpack.c.l.b16 %v785
          %v918 = vunpack.c.h.b16 %v785
          %v919 = vunpack.c.l.b16 %v786
          %v920 = vunpack.c.h.b16 %v786
          %v921 = vunpack.c.l.b16 %v787
          %v922 = vunpack.c.h.b16 %v787
          %v923 = vunpack.c.l.b16 %v788
          %v924 = vunpack.c.h.b16 %v788
          %v925 = vunpack.c.l.b16 %v789
          %v926 = vunpack.c.h.b16 %v789
          %v927 = vunpack.c.l.b16 %v790
          %v928 = vunpack.c.h.b16 %v790
          %v929 = vunpack.c.l.b16 %v791
          %v930 = vunpack.c.h.b16 %v791
          %v931 = vunpack.c.l.b16 %v792
          %v932 = vunpack.c.h.b16 %v792
          %v933 = vunpack.c.l.b16 %v793
          %v934 = vunpack.c.h.b16 %v793
          %v935 = vunpack.c.l.b16 %v794
          %v936 = vunpack.c.h.b16 %v794
          %v937 = vunpack.c.l.b16 %v795
          %v938 = vunpack.c.h.b16 %v795
          %v939 = vunpack.c.l.b16 %v796
          %v940 = vunpack.c.h.b16 %v796
          %v941 = vpack.c.b16 %v847, %v845
          %v942 = vpack.c.b16 %v848, %v846
          %v943 = vpack.c.b16 %v851, %v849
          %v944 = vpack.c.b16 %v852, %v850
          %v945 = vpack.c.b16 %v855, %v853
          %v946 = vpack.c.b16 %v856, %v854
          %v947 = vpack.c.b16 %v859, %v857
          %v948 = vpack.c.b16 %v860, %v858
          %v949 = vpack.c.b16 %v863, %v861
          %v950 = vpack.c.b16 %v864, %v862
          %v951 = vpack.c.b16 %v867, %v865
          %v952 = vpack.c.b16 %v868, %v866
          %v953 = vpack.c.b16 %v871, %v869
          %v954 = vpack.c.b16 %v872, %v870
          %v955 = vpack.c.b16 %v875, %v873
          %v956 = vpack.c.b16 %v876, %v874
          %v957 = vpack.c.b16 %v879, %v877
          %v958 = vpack.c.b16 %v880, %v878
          %v959 = vpack.c.b16 %v883, %v881
          %v960 = vpack.c.b16 %v884, %v882
          %v961 = vpack.c.b16 %v887, %v885
          %v962 = vpack.c.b16 %v888, %v886
          %v963 = vpack.c.b16 %v891, %v889
          %v964 = vpack.c.b16 %v892, %v890
          %v965 = vpack.c.b16 %v895, %v893
          %v966 = vpack.c.b16 %v896, %v894
          %v967 = vpack.c.b16 %v899, %v897
          %v968 = vpack.c.b16 %v900, %v898
          %v969 = vpack.c.b16 %v903, %v901
          %v970 = vpack.c.b16 %v904, %v902
          %v971 = vpack.c.b16 %v907, %v905
          %v972 = vpack.c.b16 %v908, %v906
          %v973 = vpack.c.b16 %v911, %v909
          %v974 = vpack.c.b16 %v912, %v910
          %v975 = vpack.c.b16 %v915, %v913
          %v976 = vpack.c.b16 %v916, %v914
          %v977 = vpack.c.b16 %v919, %v917
          %v978 = vpack.c.b16 %v920, %v918
          %v979 = vpack.c.b16 %v923, %v921
          %v980 = vpack.c.b16 %v924, %v922
          %v981 = vpack.c.b16 %v927, %v925
          %v982 = vpack.c.b16 %v928, %v926
          %v983 = vpack.c.b16 %v931, %v929
          %v984 = vpack.c.b16 %v932, %v930
          %v985 = vpack.c.b16 %v935, %v933
          %v986 = vpack.c.b16 %v936, %v934
          %v987 = vpack.c.b16 %v939, %v937
          %v988 = vpack.c.b16 %v940, %v938
          %1037 = vmatprep.subr.bf16.mxu0 %v956
          %1038 = vmatpush1.bf16.msra.mxu0 %v955
          %1039 = vmatprep.subr.bf16.mxu0 %v954
          %1040 = vmatpush1.bf16.msra.mxu0 %v953
          %1041 = vmatprep.subr.bf16.mxu0 %v952
          %1042 = vmatpush1.bf16.msra.mxu0 %v951
          %1043 = vmatprep.subr.bf16.mxu0 %v950
          %1044 = vmatpush1.bf16.msra.mxu0 %v949
          %1045 = vmatprep.subr.bf16.mxu0 %v948
          %1046 = vmatpush1.bf16.msra.mxu0 %v947
          %1047 = vmatprep.subr.bf16.mxu0 %v946
          %1048 = vmatpush1.bf16.msra.mxu0 %v945
          %1049 = vmatprep.subr.bf16.mxu0 %v944
          %1050 = vmatpush1.bf16.msra.mxu0 %v943
          %1051 = vmatprep.subr.bf16.mxu0 %v942
          %1052 = vmatpush1.bf16.msra.mxu0 %v941
          %1053 = vmatprep.subr.bf16.mxu0 %v972
          %1054 = vmatpush2.bf16.msra.mxu0 %v971
          %1055 = vmatprep.subr.bf16.mxu0 %v970
          %1056 = vmatpush2.bf16.msra.mxu0 %v969
          %1057 = vmatprep.subr.bf16.mxu0 %v968
          %1058 = vmatpush2.bf16.msra.mxu0 %v967
          %1059 = vmatprep.subr.bf16.mxu0 %v966
          %1060 = vmatpush2.bf16.msra.mxu0 %v965
          %1061 = vmatprep.subr.bf16.mxu0 %v964
          %1062 = vmatpush2.bf16.msra.mxu0 %v963
          %1063 = vmatprep.subr.bf16.mxu0 %v962
          %1064 = vmatpush2.bf16.msra.mxu0 %v961
          %1065 = vmatprep.subr.bf16.mxu0 %v960
          %1066 = vmatpush2.bf16.msra.mxu0 %v959
          %1067 = vmatprep.subr.bf16.mxu0 %v958
          %1068 = vmatpush2.bf16.msra.mxu0 %v957
          %1069 = vmatprep.mubr.bf16.mxu0 %v747
          %1070 = vmatmul.mubr.bf16.gmra.mxu0 %v746
          %v1071 = vpop.f32.mrf.mxu0
          %v1072 = vadd.f32 0.0, %v1071
          %v1073 = vpop.f32.mrf.mxu0
          %v1074 = vadd.f32 0.0, %v1073
          %v1075 = vpop.f32.mrf.mxu0
          %v1076 = vpop.f32.mrf.mxu0
          %1077 = vdwg.mxu0
          %1078 = vmatprep.subr.bf16.mxu0 %v988
          %1079 = vmatpush1.bf16.msra.mxu0 %v987
          %1080 = vmatprep.subr.bf16.mxu0 %v986
          %1081 = vmatpush1.bf16.msra.mxu0 %v985
          %1082 = vmatprep.subr.bf16.mxu0 %v984
          %1083 = vmatpush1.bf16.msra.mxu0 %v983
          %1084 = vmatprep.subr.bf16.mxu0 %v982
          %1085 = vmatpush1.bf16.msra.mxu0 %v981
          %1086 = vmatprep.subr.bf16.mxu0 %v980
          %1087 = vmatpush1.bf16.msra.mxu0 %v979
          %1088 = vmatprep.subr.bf16.mxu0 %v978
          %1089 = vmatpush1.bf16.msra.mxu0 %v977
          %1090 = vmatprep.subr.bf16.mxu0 %v976
          %1091 = vmatpush1.bf16.msra.mxu0 %v975
          %1092 = vmatprep.subr.bf16.mxu0 %v974
          %1093 = vmatpush1.bf16.msra.mxu0 %v973
          %1094 = vmatprep.subr.bf16.mxu0 0
          %1095 = vmatpush2.bf16.msra.mxu0 0
          %1096 = vmatprep.subr.bf16.mxu0 0
          %1097 = vmatpush2.bf16.msra.mxu0 0
          %1098 = vmatprep.subr.bf16.mxu0 0
          %1099 = vmatpush2.bf16.msra.mxu0 0
          %1100 = vmatprep.subr.bf16.mxu0 0
          %1101 = vmatpush2.bf16.msra.mxu0 0
          %1102 = vmatprep.subr.bf16.mxu0 0
          %1103 = vmatpush2.bf16.msra.mxu0 0
          %1104 = vmatprep.subr.bf16.mxu0 0
          %1105 = vmatpush2.bf16.msra.mxu0 0
          %1106 = vmatprep.subr.bf16.mxu0 0
          %1107 = vmatpush2.bf16.msra.mxu0 0
          %1108 = vmatprep.subr.bf16.mxu0 0
          %1109 = vmatpush2.bf16.msra.mxu0 0
          %1110 = vmatprep.mubr.bf16.mxu0 0
          %1111 = vmatmul.mubr.bf16.gmra.mxu0 %v748
          %v1112 = vpop.f32.mrf.mxu0
          %v1113 = vadd.f32 %v1072, %v1112
          %v1114 = vpop.f32.mrf.mxu0
          %v1115 = vadd.f32 %v1074, %v1114
          %v1116 = vpop.f32.mrf.mxu0
          %v1117 = vpop.f32.mrf.mxu0
          %1118 = vdwg.mxu0
          %v1119 = vadd.f32 %v740, %v1113
          %v1120 = vadd.f32 %v741, %v1115
          %v1121 = vxor.u32 %v1119, 2147483648
          %v1122 = vxor.u32 %v1120, 2147483648
          %v1123 = vmul.f32 %v1121, 1.442695
          %v1124 = vpow.pop %v1123
          %v1125 = vmul.f32 %v1122, 1.442695
          %v1126 = vpow.pop %v1125
          %v1127 = vadd.f32 %v1124, 1.0
          %v1128 = vadd.f32 %v1126, 1.0
          %v1129 = vrcp.pop %v1127
          %v1130 = vmul.f32 1.0, %v1129
          %v1131 = vrcp.pop %v1128
          %v1132 = vmul.f32 1.0, %v1131
          %v1133 = vmul.f32 %v1132, %v743
          %1134 = vst [vmem:[#allocation4 + $0x1] sm:$0xff] %v1133
          %v1135 = vld [vmem:[#allocation4] sm:$0xff]
          %v1136 = vld [vmem:[#allocation4 + $0x1] sm:$0xff]
          %v1137 = vld [vmem:[#allocation4 + $0x2] sm:$0xff]
          %v1138 = vpack.c.bf16 %v1135, %v1135
          %v1139 = vpack.c.bf16 %v1136, %v1136
          %v1140 = vpack.c.bf16 %v1137, %v1137
          %v1141 = vld [vmem:[#allocation13] sm:$0xf]
          %v1142 = vld [vmem:[#allocation13 + $0x4] sm:$0xf]
          %v1143 = vld [vmem:[#allocation13 + $0x8] sm:$0xf]
          %v1144 = vld [vmem:[#allocation13 + $0xc] sm:$0xf]
          %v1145 = vld [vmem:[#allocation13 + $0x10] sm:$0xf]
          %v1146 = vld [vmem:[#allocation13 + $0x14] sm:$0xf]
          %v1147 = vld [vmem:[#allocation13 + $0x18] sm:$0xf]
          %v1148 = vld [vmem:[#allocation13 + $0x1c] sm:$0xf]
          %v1149 = vld [vmem:[#allocation13 + $0x20] sm:$0xf]
          %v1150 = vld [vmem:[#allocation13 + $0x24] sm:$0xf]
          %v1151 = vld [vmem:[#allocation13 + $0x28] sm:$0xf]
          %v1152 = vld [vmem:[#allocation13 + $0x2c] sm:$0xf]
          %v1153 = vld [vmem:[#allocation13 + $0x30] sm:$0xf]
          %v1154 = vld [vmem:[#allocation13 + $0x34] sm:$0xf]
          %v1155 = vld [vmem:[#allocation13 + $0x38] sm:$0xf]
          %v1156 = vld [vmem:[#allocation13 + $0x3c] sm:$0xf]
          %v1157 = vld [vmem:[#allocation13 + $0x40] sm:$0xf]
          %v1158 = vld [vmem:[#allocation13 + $0x44] sm:$0xf]
          %v1159 = vld [vmem:[#allocation13 + $0x48] sm:$0xf]
          %v1160 = vld [vmem:[#allocation13 + $0x4c] sm:$0xf]
          %v1161 = vld [vmem:[#allocation13 + $0x50] sm:$0xf]
          %v1162 = vld [vmem:[#allocation13 + $0x54] sm:$0xf]
          %v1163 = vld [vmem:[#allocation13 + $0x58] sm:$0xf]
          %v1164 = vld [vmem:[#allocation13 + $0x5c] sm:$0xf]
          %v1165 = vld [vmem:[#allocation13 + $0x60] sm:$0xf]
          %v1166 = vld [vmem:[#allocation13 + $0x64] sm:$0xf]
          %v1167 = vld [vmem:[#allocation13 + $0x68] sm:$0xf]
          %v1168 = vld [vmem:[#allocation13 + $0x6c] sm:$0xf]
          %v1169 = vld [vmem:[#allocation13 + $0x70] sm:$0xf]
          %v1170 = vld [vmem:[#allocation13 + $0x74] sm:$0xf]
          %v1171 = vld [vmem:[#allocation13 + $0x78] sm:$0xf]
          %v1172 = vld [vmem:[#allocation13 + $0x7c] sm:$0xf]
          %v1173 = vld [vmem:[#allocation13 + $0x80] sm:$0xf]
          %v1174 = vld [vmem:[#allocation13 + $0x84] sm:$0xf]
          %v1175 = vld [vmem:[#allocation13 + $0x88] sm:$0xf]
          %v1176 = vld [vmem:[#allocation13 + $0x8c] sm:$0xf]
          %v1177 = vld [vmem:[#allocation13 + $0x90] sm:$0xf]
          %v1178 = vld [vmem:[#allocation13 + $0x94] sm:$0xf]
          %v1179 = vld [vmem:[#allocation13 + $0x98] sm:$0xf]
          %v1180 = vld [vmem:[#allocation13 + $0x9c] sm:$0xf]
          %v1181 = vld [vmem:[#allocation13 + $0xa0] sm:$0xf]
          %v1182 = vld [vmem:[#allocation13 + $0xa4] sm:$0xf]
          %v1183 = vld [vmem:[#allocation13 + $0xa8] sm:$0xf]
          %v1184 = vld [vmem:[#allocation13 + $0xac] sm:$0xf]
          %v1185 = vld [vmem:[#allocation13 + $0xb0] sm:$0xf]
          %v1186 = vld [vmem:[#allocation13 + $0xb4] sm:$0xf]
          %v1187 = vld [vmem:[#allocation13 + $0xb8] sm:$0xf]
          %v1188 = vld [vmem:[#allocation13 + $0xbc] sm:$0xf]
          %v1237 = vunpack.c.l.b16 %v1141
          %v1238 = vunpack.c.l.b16 %v1142
          %v1239 = vunpack.c.l.b16 %v1143
          %v1240 = vunpack.c.l.b16 %v1144
          %v1241 = vunpack.c.l.b16 %v1145
          %v1242 = vunpack.c.l.b16 %v1146
          %v1243 = vunpack.c.l.b16 %v1147
          %v1244 = vunpack.c.l.b16 %v1148
          %v1245 = vunpack.c.l.b16 %v1149
          %v1246 = vunpack.c.l.b16 %v1150
          %v1247 = vunpack.c.l.b16 %v1151
          %v1248 = vunpack.c.l.b16 %v1152
          %v1249 = vunpack.c.l.b16 %v1153
          %v1250 = vunpack.c.l.b16 %v1154
          %v1251 = vunpack.c.l.b16 %v1155
          %v1252 = vunpack.c.l.b16 %v1156
          %v1253 = vunpack.c.l.b16 %v1157
          %v1254 = vunpack.c.l.b16 %v1158
          %v1255 = vunpack.c.l.b16 %v1159
          %v1256 = vunpack.c.l.b16 %v1160
          %v1257 = vunpack.c.l.b16 %v1161
          %v1258 = vunpack.c.l.b16 %v1162
          %v1259 = vunpack.c.l.b16 %v1163
          %v1260 = vunpack.c.l.b16 %v1164
          %v1261 = vunpack.c.l.b16 %v1165
          %v1262 = vunpack.c.l.b16 %v1166
          %v1263 = vunpack.c.l.b16 %v1167
          %v1264 = vunpack.c.l.b16 %v1168
          %v1265 = vunpack.c.l.b16 %v1169
          %v1266 = vunpack.c.l.b16 %v1170
          %v1267 = vunpack.c.l.b16 %v1171
          %v1268 = vunpack.c.l.b16 %v1172
          %v1269 = vunpack.c.l.b16 %v1173
          %v1270 = vunpack.c.l.b16 %v1174
          %v1271 = vunpack.c.l.b16 %v1175
          %v1272 = vunpack.c.l.b16 %v1176
          %v1273 = vunpack.c.l.b16 %v1177
          %v1274 = vunpack.c.l.b16 %v1178
          %v1275 = vunpack.c.l.b16 %v1179
          %v1276 = vunpack.c.l.b16 %v1180
          %v1277 = vunpack.c.l.b16 %v1181
          %v1278 = vunpack.c.l.b16 %v1182
          %v1279 = vunpack.c.l.b16 %v1183
          %v1280 = vunpack.c.l.b16 %v1184
          %v1281 = vunpack.c.l.b16 %v1185
          %v1282 = vunpack.c.l.b16 %v1186
          %v1283 = vunpack.c.l.b16 %v1187
          %v1284 = vunpack.c.l.b16 %v1188
          %v1285 = vpack.c.b16 %v1238, %v1237
          %v1286 = vpack.c.b16 %v1240, %v1239
          %v1287 = vpack.c.b16 %v1242, %v1241
          %v1288 = vpack.c.b16 %v1244, %v1243
          %v1289 = vpack.c.b16 %v1246, %v1245
          %v1290 = vpack.c.b16 %v1248, %v1247
          %v1291 = vpack.c.b16 %v1250, %v1249
          %v1292 = vpack.c.b16 %v1252, %v1251
          %v1293 = vpack.c.b16 %v1254, %v1253
          %v1294 = vpack.c.b16 %v1256, %v1255
          %v1295 = vpack.c.b16 %v1258, %v1257
          %v1296 = vpack.c.b16 %v1260, %v1259
          %v1297 = vpack.c.b16 %v1262, %v1261
          %v1298 = vpack.c.b16 %v1264, %v1263
          %v1299 = vpack.c.b16 %v1266, %v1265
          %v1300 = vpack.c.b16 %v1268, %v1267
          %v1301 = vpack.c.b16 %v1270, %v1269
          %v1302 = vpack.c.b16 %v1272, %v1271
          %v1303 = vpack.c.b16 %v1274, %v1273
          %v1304 = vpack.c.b16 %v1276, %v1275
          %v1305 = vpack.c.b16 %v1278, %v1277
          %v1306 = vpack.c.b16 %v1280, %v1279
          %v1307 = vpack.c.b16 %v1282, %v1281
          %v1308 = vpack.c.b16 %v1284, %v1283
          %1333 = vmatprep.subr.bf16.mxu0 0
          %1334 = vmatpush1.bf16.msra.mxu0 %v1292
          %1335 = vmatprep.subr.bf16.mxu0 0
          %1336 = vmatpush1.bf16.msra.mxu0 %v1291
          %1337 = vmatprep.subr.bf16.mxu0 0
          %1338 = vmatpush1.bf16.msra.mxu0 %v1290
          %1339 = vmatprep.subr.bf16.mxu0 0
          %1340 = vmatpush1.bf16.msra.mxu0 %v1289
          %1341 = vmatprep.subr.bf16.mxu0 0
          %1342 = vmatpush1.bf16.msra.mxu0 %v1288
          %1343 = vmatprep.subr.bf16.mxu0 0
          %1344 = vmatpush1.bf16.msra.mxu0 %v1287
          %1345 = vmatprep.subr.bf16.mxu0 0
          %1346 = vmatpush1.bf16.msra.mxu0 %v1286
          %1347 = vmatprep.subr.bf16.mxu0 0
          %1348 = vmatpush1.bf16.msra.mxu0 %v1285
          %1349 = vmatprep.subr.bf16.mxu0 0
          %1350 = vmatpush2.bf16.msra.mxu0 %v1300
          %1351 = vmatprep.subr.bf16.mxu0 0
          %1352 = vmatpush2.bf16.msra.mxu0 %v1299
          %1353 = vmatprep.subr.bf16.mxu0 0
          %1354 = vmatpush2.bf16.msra.mxu0 %v1298
          %1355 = vmatprep.subr.bf16.mxu0 0
          %1356 = vmatpush2.bf16.msra.mxu0 %v1297
          %1357 = vmatprep.subr.bf16.mxu0 0
          %1358 = vmatpush2.bf16.msra.mxu0 %v1296
          %1359 = vmatprep.subr.bf16.mxu0 0
          %1360 = vmatpush2.bf16.msra.mxu0 %v1295
          %1361 = vmatprep.subr.bf16.mxu0 0
          %1362 = vmatpush2.bf16.msra.mxu0 %v1294
          %1363 = vmatprep.subr.bf16.mxu0 0
          %1364 = vmatpush2.bf16.msra.mxu0 %v1293
          %1365 = vmatprep.mubr.bf16.mxu0 %v1139
          %1366 = vmatmul.mubr.bf16.gmra.mxu0 %v1138
          %v1367 = vpop.f32.mrf.mxu0
          %v1368 = vadd.f32 0.0, %v1367
          %v1369 = vpop.f32.mrf.mxu0
          %v1370 = vpop.f32.mrf.mxu0
          %v1371 = vpop.f32.mrf.mxu0
          %1372 = vdwg.mxu0
          %1373 = vmatprep.subr.bf16.mxu0 0
          %1374 = vmatpush1.bf16.msra.mxu0 %v1308
          %1375 = vmatprep.subr.bf16.mxu0 0
          %1376 = vmatpush1.bf16.msra.mxu0 %v1307
          %1377 = vmatprep.subr.bf16.mxu0 0
          %1378 = vmatpush1.bf16.msra.mxu0 %v1306
          %1379 = vmatprep.subr.bf16.mxu0 0
          %1380 = vmatpush1.bf16.msra.mxu0 %v1305
          %1381 = vmatprep.subr.bf16.mxu0 0
          %1382 = vmatpush1.bf16.msra.mxu0 %v1304
          %1383 = vmatprep.subr.bf16.mxu0 0
          %1384 = vmatpush1.bf16.msra.mxu0 %v1303
          %1385 = vmatprep.subr.bf16.mxu0 0
          %1386 = vmatpush1.bf16.msra.mxu0 %v1302
          %1387 = vmatprep.subr.bf16.mxu0 0
          %1388 = vmatpush1.bf16.msra.mxu0 %v1301
          %1389 = vmatprep.subr.bf16.mxu0 0
          %1390 = vmatpush2.bf16.msra.mxu0 0
          %1391 = vmatprep.subr.bf16.mxu0 0
          %1392 = vmatpush2.bf16.msra.mxu0 0
          %1393 = vmatprep.subr.bf16.mxu0 0
          %1394 = vmatpush2.bf16.msra.mxu0 0
          %1395 = vmatprep.subr.bf16.mxu0 0
          %1396 = vmatpush2.bf16.msra.mxu0 0
          %1397 = vmatprep.subr.bf16.mxu0 0
          %1398 = vmatpush2.bf16.msra.mxu0 0
          %1399 = vmatprep.subr.bf16.mxu0 0
          %1400 = vmatpush2.bf16.msra.mxu0 0
          %1401 = vmatprep.subr.bf16.mxu0 0
          %1402 = vmatpush2.bf16.msra.mxu0 0
          %1403 = vmatprep.subr.bf16.mxu0 0
          %1404 = vmatpush2.bf16.msra.mxu0 0
          %1405 = vmatprep.mubr.bf16.mxu0 0
          %1406 = vmatmul.mubr.bf16.gmra.mxu0 %v1140
          %v1407 = vpop.f32.mrf.mxu0
          %v1408 = vadd.f32 %v1368, %v1407
          %v1409 = vpop.f32.mrf.mxu0
          %v1410 = vpop.f32.mrf.mxu0
          %v1411 = vpop.f32.mrf.mxu0
          %1412 = vdwg.mxu0
          %v1413 = vadd.f32 %v742, %v1408
          %v1414 = vtanh.pop %v1413
          %v1415 = vsub.f32 1.0, %v1130
          %v1416 = vmul.f32 %v1415, %v743
          %v1417 = vmul.f32 %v1130, %v1414
          %v1418 = vadd.f32 %v1416, %v1417
          %1419 = vst [vmem:[#allocation3 + $0x1] sm:$0xff] %v1418
        $region69: #{tpu_custom_call.1} parent=43 // loop_footer
          %s733 = sadd.s32 1, %s729
        $region70: #{tpu_custom_call.1} parent=43 // loop_footer_branch
          %728 = sbr.rel target = $region66
        $region71: #{tpu_custom_call.1} parent=43 // loop_exit
          _
        %v1420 = vld [vmem:[#allocation3 + $0x1] sm:$0xff]
        %1421 = vst [vmem:[%s349] sm:$0xff] %v1420
        %s1422 = sand.u32 %s171, 1
        %s1423 = scalar_lea.sflag [#allocation7], %s1422
        %s1424 = sand.u32 %s171, 1
        %s1425 = smul.addr %s1424, 8
        %s1426 = scalar_lea.vmem [#allocation14], %s1425
        // Predicated region
        $region72: #{tpu_custom_call.1} parent=43 // pred_check
          %p1427 = pneg %p181
        $region73: #{tpu_custom_call.1} parent=43 // pred_check_branch
          %1429 = sbr.rel (%p1427) target = $region75
        $region74: #{tpu_custom_call.1} parent=43 // pred_region
          %s1431 = ssub.s32 128, 128
          %1432 = vsyncadd %s1423, %s1431
          %s1433 = smul.addr %s27, 128
          %s1434 = scalar_lea.hbm %s6, %s1433
          %s1436 = sshll.u32 %s1426, 4
          %s1437 = int_to_ptr.vmem [resolvable:$true] %s1436
          %1439 = dma.vmem_to_hbm [thread:$0]  %s1437, 128, %s1434, %s1423
        $region75: #{tpu_custom_call.1} parent=43 // pred_fallthru
          _
      $region44: #{tpu_custom_call.1} parent=5 // pred_fallthru
        _
      %p1440 = scmp.le.s32.totalorder 2, %s22
      // Predicated region
      $region76: #{tpu_custom_call.1} parent=5 // pred_check
        %p1441 = pneg %p1440
      $region77: #{tpu_custom_call.1} parent=5 // pred_check_branch
        %1443 = sbr.rel (%p1441) target = $region79
      $region78: #{tpu_custom_call.1} parent=5 // pred_region
        %s1444 = ssub.s32 %s22, 2
        // Predicated region
        $region80: #{tpu_custom_call.1} parent=78 // pred_check
          %p1445 = pneg %p187
        $region81: #{tpu_custom_call.1} parent=78 // pred_check_branch
          %1447 = sbr.rel (%p1445) target = $region83
        $region82: #{tpu_custom_call.1} parent=78 // pred_region
          %s1448 = sand.u32 %s172, 1
          %s1449 = scalar_lea.sflag [#allocation7], %s1448
          %s1450 = sand.u32 %s172, 1
          %s1451 = smul.addr %s1450, 8
          %s1452 = scalar_lea.vmem [#allocation14], %s1451
          %1453 = dma.done %s1449, 128
        $region83: #{tpu_custom_call.1} parent=78 // pred_fallthru
          _
      $region79: #{tpu_custom_call.1} parent=5 // pred_fallthru
        _
    $region6: #{tpu_custom_call.1} parent=1 // loop_footer
      %s26 = sadd.s32 1, %s22
    $region7: #{tpu_custom_call.1} parent=1 // loop_footer_branch
      %21 = sbr.rel target = $region3
    $region8: #{tpu_custom_call.1} parent=1 // loop_exit
      _
    %1454 = vsyncpa [#allocation6], 1
    %s1455 = scalar_lea.sflag [#allocation6], 1
    %1456 = vsyncpa %s1455, 1
    %1457 = vsyncpa [#allocation9], 1
    %s1458 = scalar_lea.sflag [#allocation9], 1
    %1459 = vsyncpa %s1458, 1
    %1460 = vsyncpa [#allocation12], 1
    %1461 = vsyncpa [#allocation7], 1
    %s1462 = scalar_lea.sflag [#allocation7], 1
    %1463 = vsyncpa %s1462, 1

</llo_original>
